<compile_context>
chip_gen: v5e
topology: v5e:2x2
jax: 0.10.0
libtpu: 0.0.40
codegen_flags: <defaults>
</compile_context>

<pallas_src>
import functools

import jax
import jax.numpy as jnp
import numpy as np
from jax import lax
from jax.experimental import pallas as pl
from jax.experimental.pallas import tpu as pltpu


# ----------------------------- Pallas kernel ---------------------------------


def _hbond_kernel(ni_ref, ca_ref, cp_ref, oj_ref, cj_ref,
                  ci_ref, maski_ref, cjc_ref, jx_ref, mij_ref,
                  hb_ref, mhb_ref, h_ref,
                  *, cutoff_energy, cutoff_distance, cutoff_gap, eps,
                  coefficient, length_nh):
    # ---- per-node coordinates: (1, 3, TN) -> three (1, TN) lane-major planes ----
    ni = ni_ref[...]
    ca = ca_ref[...]
    cp = cp_ref[...]
    nx, ny, nz = ni[0, 0:1, :], ni[0, 1:2, :], ni[0, 2:3, :]
    ax, ay, az = ca[0, 0:1, :], ca[0, 1:2, :], ca[0, 2:3, :]
    px, py, pz = cp[0, 0:1, :], cp[0, 1:2, :], cp[0, 2:3, :]

    def normed3(vx, vy, vz):  # v / sqrt(|v|^2 + 1e-3), pure VPU (no cross-sublane reduce)
        inv = lax.rsqrt(vx * vx + vy * vy + vz * vz + 1e-3)
        return vx * inv, vy * inv, vz * inv

    u1x, u1y, u1z = normed3(nx - px, ny - py, nz - pz)   # N_i - C_{i-1}
    u2x, u2y, u2z = normed3(nx - ax, ny - ay, nz - az)   # N_i - Ca_i
    ux, uy, uz = normed3(u1x + u2x, u1y + u2y, u1z + u2z)
    hx = nx + length_nh * ux                             # virtual hydrogen H_i
    hy = ny + length_nh * uy
    hz = nz + length_nh * uz
    h_ref[...] = jnp.concatenate([hx, hy, hz], axis=0)[None]

    # ---- per-edge neighbor coords: (1, 3, K, TN) -> (K, TN) planes ----
    oj = oj_ref[...]
    cj = cj_ref[...]
    ox, oy, oz = oj[0, 0], oj[0, 1], oj[0, 2]
    cx, cy, cz = cj[0, 0], cj[0, 1], cj[0, 2]

    def d2(bx, by, bz, qx, qy, qz):
        dx = bx - qx
        dy = by - qy
        dz = bz - qz
        return dx * dx + dy * dy + dz * dz

    d2_no = d2(nx, ny, nz, ox, oy, oz)
    inv_no = lax.rsqrt(d2_no + eps)
    inv_nc = lax.rsqrt(d2(nx, ny, nz, cx, cy, cz) + eps)
    inv_hc = lax.rsqrt(d2(hx, hy, hz, cx, cy, cz) + eps)
    inv_ho = lax.rsqrt(d2(hx, hy, hz, ox, oy, oz) + eps)
    u_ij = coefficient * (inv_no - inv_nc + inv_hc - inv_ho)

    # distance cutoff on squared distance (sqrt is monotone -> exact rewrite, saves an EUP op)
    cut = (d2_no + eps) < (cutoff_distance * cutoff_distance)

    # ---- masks (boolean fusion, single cast) ----
    jx = jx_ref[...][0]         # (K, TN) int32 neighbor residue index j
    cjc = cjc_ref[...][0]       # (K, TN) int32 neighbor chain id
    ci = ci_ref[...][0]         # (1, TN) int32 own chain id
    maski = maski_ref[...][0]   # (1, TN) f32   (C > 0) & (C == C_prev)
    mij = mij_ref[...][0]       # (K, TN) f32   edge mask

    tn = jx.shape[-1]
    ix = pl.program_id(1) * tn + lax.broadcasted_iota(jnp.int32, jx.shape, 1)
    local = jnp.logical_and(jnp.abs(jx - ix) < cutoff_gap, ci == cjc)
    keep = jnp.logical_and(jnp.logical_not(local),
                           jnp.logical_and(cut, cjc > 0))

    mask_hb = mij * maski * keep.astype(jnp.float32)
    mhb_ref[...] = mask_hb[None]
    hb_ref[...] = jnp.where(u_ij < cutoff_energy, mask_hb, 0.0)[None]


# ------------------------------ JAX wrapper -----------------------------------


def _choose_tile_n(n, target=512):
    """Tile size along residues (lane axis): full N if small, else a /128 divisor."""
    if n <= target:
        return n
    tn = (target // 128) * 128
    while tn >= 128:
        if n % tn == 0:
            return tn
        tn -= 128
    return n


def backbone_hbonds(X, C, edge_idx, mask_ij,
                    cutoff_energy=-0.5, cutoff_distance=3.6, cutoff_gap=3,
                    distance_eps=1e-3):
    """Pallas implementation of BackboneHBonds.forward.

    X: (B, N, 4, 3) float  -- atoms [N, Ca, C, O]
    C: (B, N) int          -- chain map
    edge_idx: (B, N, K) int
    mask_ij: (B, N, K) float
    Returns: hbonds (B,N,K), mask_hb_ij (B,N,K), H_i (B,N,1,3)
    """
    X = X.astype(jnp.float32)
    C = C.astype(jnp.int32)
    edge_idx = edge_idx.astype(jnp.int32)
    mask_ij = mask_ij.astype(jnp.float32)

    B, N, _, _ = X.shape
    K = edge_idx.shape[-1]

    # coord-major per-node slabs (B, 3, N): residues land on TPU lanes
    Ni_t = jnp.transpose(X[:, :, 0, :], (0, 2, 1))
    Ca_t = jnp.transpose(X[:, :, 1, :], (0, 2, 1))
    Cc_t = jnp.transpose(X[:, :, 2, :], (0, 2, 1))   # carbonyl C
    Oc_t = jnp.transpose(X[:, :, 3, :], (0, 2, 1))   # carbonyl O
    # previous residue's carbonyl C (replicate pad along residues)
    Cp_t = jnp.concatenate([Cc_t[:, :, :1], Cc_t[:, :, :-1]], axis=2)

    # gather neighbors directly into the lane-major kernel layout (no post-gather transpose)
    # TODO(synk): gather stays in XLA; an in-kernel DMA gather with scalar-prefetched edge_idx
    # would remove one more HBM pass but needs manual per-row copies.
    idx_t = jnp.transpose(edge_idx, (0, 2, 1))                 # (B, K, N)
    O_j = jax.vmap(lambda x, i: x[:, i])(Oc_t, idx_t)          # (B, 3, K, N)
    C_j = jax.vmap(lambda x, i: x[:, i])(Cc_t, idx_t)          # (B, 3, K, N)
    Cj_chain = jax.vmap(lambda c, i: c[i])(C, idx_t)           # (B, K, N)

    # per-node chain mask, precomputed (no K-broadcast integer inputs shipped to the kernel)
    # literal translation of F.pad(C, [1, 0], 'constant')[:, 1:]
    C_prev_chain = jnp.pad(C, ((0, 0), (1, 0)))[:, 1:]
    mask_i = jnp.logical_and(C > 0, C == C_prev_chain).astype(jnp.float32)

    Ci_n = C[:, None, :]                                       # (B, 1, N) int32
    maski_n = mask_i[:, None, :]                               # (B, 1, N) f32
    mask_ij_t = jnp.transpose(mask_ij, (0, 2, 1))              # (B, K, N)

    TN = _choose_tile_n(N)
    grid = (B, N // TN)

    spec_nc = pl.BlockSpec((1, 3, TN), lambda b, n: (b, 0, n))        # per-node coords
    spec_ec = pl.BlockSpec((1, 3, K, TN), lambda b, n: (b, 0, 0, n))  # per-edge coords
    spec_e = pl.BlockSpec((1, K, TN), lambda b, n: (b, 0, n))         # per-edge scalars
    spec_n = pl.BlockSpec((1, 1, TN), lambda b, n: (b, 0, n))         # per-node scalars

    kernel = functools.partial(
        _hbond_kernel,
        cutoff_energy=float(cutoff_energy),
        cutoff_distance=float(cutoff_distance),
        cutoff_gap=float(cutoff_gap),
        eps=float(distance_eps),
        coefficient=0.42 * 0.2 * 332.0,
        length_nh=1.015,
    )

    out_shapes = (
        jax.ShapeDtypeStruct((B, K, N), jnp.float32),   # hbonds   (lane-major)
        jax.ShapeDtypeStruct((B, K, N), jnp.float32),   # mask_hb  (lane-major)
        jax.ShapeDtypeStruct((B, 3, N), jnp.float32),   # H_i      (coord-major)
    )

    hb_t, mhb_t, H_t = pl.pallas_call(
        kernel,
        out_shape=out_shapes,
        grid=grid,
        in_specs=[spec_nc, spec_nc, spec_nc, spec_ec, spec_ec,
                  spec_n, spec_n, spec_e, spec_e, spec_e],
        out_specs=(spec_e, spec_e, spec_nc),
        compiler_params=pltpu.CompilerParams(
            dimension_semantics=("parallel", "parallel")),
    )(Ni_t, Ca_t, Cp_t, O_j, C_j, Ci_n, maski_n, Cj_chain, idx_t, mask_ij_t)

    hbonds = jnp.transpose(hb_t, (0, 2, 1))
    mask_hb = jnp.transpose(mhb_t, (0, 2, 1))
    H_i = jnp.transpose(H_t, (0, 2, 1))[:, :, None, :]            # (B, N, 1, 3)
    return hbonds, mask_hb, H_i


# -------------------------- pure-JAX reference --------------------------------


def _collect_neighbors(x, edge_idx):
    """x: (B, N, D), edge_idx: (B, N, K) -> (B, N, K, D)."""
    B, N, D = x.shape
    K = edge_idx.shape[-1]
    idx = edge_idx.reshape(B, N * K)[:, :, None]
    g = jnp.take_along_axis(x, idx, axis=1)
    return g.reshape(B, N, K, D)


def backbone_hbonds_ref(X, C, edge_idx, mask_ij,
                        cutoff_energy=-0.5, cutoff_distance=3.6, cutoff_gap=3,
                        distance_eps=1e-3):
    X = X.astype(jnp.float32)
    C = C.astype(jnp.int32)
    edge_idx = edge_idx.astype(jnp.int32)
    mask_ij = mask_ij.astype(jnp.float32)
    B, N, _, _ = X.shape
    K = edge_idx.shape[-1]
    coeff = 0.42 * 0.2 * 332.0

    def normed(v):
        return v / jnp.sqrt(jnp.sum(v * v, axis=-1, keepdims=True) + 1e-3)

    X_flat = X.reshape(B, N, -1)
    X_j = _collect_neighbors(X_flat, edge_idx).reshape(B, N, K, -1, 3)
    X_prev = jnp.concatenate([X[:, :1], X[:, :-1]], axis=1)
    C_prev_i = X_prev[:, :, 2, :]
    N_i = X[:, :, 0, :]
    Ca_i = X[:, :, 1, :]
    u1 = normed(N_i - C_prev_i)
    u2 = normed(N_i - Ca_i)
    H_i = N_i + 1.015 * normed(u1 + u2)
    N_e = N_i[:, :, None, :]
    H_e = H_i[:, :, None, :]
    O_j = X_j[:, :, :, 3, :]
    C_j = X_j[:, :, :, 2, :]

    def invD(a, b):
        return 1.0 / jnp.sqrt(jnp.sum((a - b) ** 2, -1) + distance_eps)

    U = coeff * (invD(N_e, O_j) - invD(N_e, C_j) + invD(H_e, C_j) - invD(H_e, O_j))
    D = jnp.sqrt(jnp.sum((N_e - O_j) ** 2, -1) + distance_eps)
    mask_cut = (D < cutoff_distance).astype(jnp.float32)

    Cj_chain = _collect_neighbors(C[:, :, None], edge_idx)[..., 0]
    ix = jnp.arange(N, dtype=jnp.int32)[None, :, None]
    dij = jnp.abs(edge_idx - ix)
    same = (C[:, :, None] == Cj_chain).astype(jnp.float32)
    nonlocal_m = 1.0 - (dij < cutoff_gap).astype(jnp.float32) * same

    C_prev = jnp.pad(C, ((0, 0), (1, 0)))[:, 1:]
    mask_i = ((C > 0) & (C == C_prev)).astype(jnp.float32)
    mask_internal = mask_i[:, :, None] * (Cj_chain > 0).astype(jnp.float32)

    mask_hb = mask_ij * nonlocal_m * mask_cut * mask_internal
    hbonds = mask_hb * (U < cutoff_energy).astype(jnp.float32)
    return hbonds, mask_hb, H_i[:, :, None, :]


# ---------------------------------- main ---------------------------------------


if __name__ == "__main__":
    B, N, K = 2, 16, 8

    key = jax.random.PRNGKey(0)
    kx, ke, km = jax.random.split(key, 3)

    # vaguely chain-like backbone coordinates: noise + translation along x per residue
    X = (jax.random.normal(kx, (B, N, 4, 3), jnp.float32) * 1.5
         + jnp.arange(N, dtype=jnp.float32)[None, :, None, None]
         * jnp.array([2.5, 0.0, 0.0], jnp.float32))
    C = jnp.broadcast_to(
        jnp.where(jnp.arange(N) < N // 2, 1, 2).astype(jnp.int32)[None, :], (B, N))
    edge_idx = jax.random.randint(ke, (B, N, K), 0, N, dtype=jnp.int32)
    mask_ij = (jax.random.uniform(km, (B, N, K)) > 0.2).astype(jnp.float32)

    hbonds, mask_hb, H_i = backbone_hbonds(X, C, edge_idx, mask_ij)
    jax.block_until_ready((hbonds, mask_hb, H_i))

    hb_r, mhb_r, H_r = backbone_hbonds_ref(X, C, edge_idx, mask_ij)
    assert hbonds.shape == (B, N, K) and mask_hb.shape == (B, N, K)
    assert H_i.shape == (B, N, 1, 3)
    np.testing.assert_allclose(np.asarray(H_i), np.asarray(H_r), atol=1e-5, rtol=1e-5)
    np.testing.assert_allclose(np.asarray(mask_hb), np.asarray(mhb_r), atol=1e-6)
    np.testing.assert_allclose(np.asarray(hbonds), np.asarray(hb_r), atol=1e-6)

    print("KERNEL_OK")
</pallas_src>

<mosaic_0001>
module attributes {stable_mosaic.version = 11 : i64} {
  func.func @_hbond_kernel(%arg0: i32, %arg1: i32, %arg2: memref<1x3x16xf32, #tpu.memory_space<vmem>>, %arg3: memref<1x3x16xf32, #tpu.memory_space<vmem>>, %arg4: memref<1x3x16xf32, #tpu.memory_space<vmem>>, %arg5: memref<1x3x8x16xf32, #tpu.memory_space<vmem>>, %arg6: memref<1x3x8x16xf32, #tpu.memory_space<vmem>>, %arg7: memref<1x1x16xi32, #tpu.memory_space<vmem>>, %arg8: memref<1x1x16xf32, #tpu.memory_space<vmem>>, %arg9: memref<1x8x16xi32, #tpu.memory_space<vmem>>, %arg10: memref<1x8x16xi32, #tpu.memory_space<vmem>>, %arg11: memref<1x8x16xf32, #tpu.memory_space<vmem>>, %arg12: memref<1x8x16xf32, #tpu.memory_space<vmem>>, %arg13: memref<1x8x16xf32, #tpu.memory_space<vmem>>, %arg14: memref<1x3x16xf32, #tpu.memory_space<vmem>>) attributes {dimension_semantics = [#tpu.dimension_semantics<parallel>, #tpu.dimension_semantics<parallel>], iteration_bounds = array<i64: 2, 1>, scalar_prefetch = 0 : i64, scratch_operands = 0 : i64, tpu.core_type = #tpu.core_type<tc>, window_params = [{transform_indices = @transform_0, window_bounds = array<i64: 1, 3, 16>}, {transform_indices = @transform_1, window_bounds = array<i64: 1, 3, 16>}, {transform_indices = @transform_2, window_bounds = array<i64: 1, 3, 16>}, {transform_indices = @transform_3, window_bounds = array<i64: 1, 3, 8, 16>}, {transform_indices = @transform_4, window_bounds = array<i64: 1, 3, 8, 16>}, {transform_indices = @transform_5, window_bounds = array<i64: 1, 1, 16>}, {transform_indices = @transform_6, window_bounds = array<i64: 1, 1, 16>}, {transform_indices = @transform_7, window_bounds = array<i64: 1, 8, 16>}, {transform_indices = @transform_8, window_bounds = array<i64: 1, 8, 16>}, {transform_indices = @transform_9, window_bounds = array<i64: 1, 8, 16>}, {transform_indices = @transform_10, window_bounds = array<i64: 1, 8, 16>}, {transform_indices = @transform_11, window_bounds = array<i64: 1, 8, 16>}, {transform_indices = @transform_12, window_bounds = array<i64: 1, 3, 16>}]} {
    %c0 = arith.constant 0 : index
    %c0_0 = arith.constant 0 : index
    %c0_1 = arith.constant 0 : index
    %0 = vector.load %arg2[%c0, %c0_0, %c0_1] : memref<1x3x16xf32, #tpu.memory_space<vmem>>, vector<1x3x16xf32>
    %c0_2 = arith.constant 0 : index
    %c0_3 = arith.constant 0 : index
    %c0_4 = arith.constant 0 : index
    %1 = vector.load %arg3[%c0_2, %c0_3, %c0_4] : memref<1x3x16xf32, #tpu.memory_space<vmem>>, vector<1x3x16xf32>
    %c0_5 = arith.constant 0 : index
    %c0_6 = arith.constant 0 : index
    %c0_7 = arith.constant 0 : index
    %2 = vector.load %arg4[%c0_5, %c0_6, %c0_7] : memref<1x3x16xf32, #tpu.memory_space<vmem>>, vector<1x3x16xf32>
    %3 = vector.extract_strided_slice %0 {offsets = [0, 0, 0], sizes = [1, 1, 16], strides = [1, 1, 1]} : vector<1x3x16xf32> to vector<1x1x16xf32>
    %4 = vector.shape_cast %3 : vector<1x1x16xf32> to vector<1x16xf32>
    %5 = vector.extract_strided_slice %0 {offsets = [0, 1, 0], sizes = [1, 1, 16], strides = [1, 1, 1]} : vector<1x3x16xf32> to vector<1x1x16xf32>
    %6 = vector.shape_cast %5 : vector<1x1x16xf32> to vector<1x16xf32>
    %7 = vector.extract_strided_slice %0 {offsets = [0, 2, 0], sizes = [1, 1, 16], strides = [1, 1, 1]} : vector<1x3x16xf32> to vector<1x1x16xf32>
    %8 = vector.shape_cast %7 : vector<1x1x16xf32> to vector<1x16xf32>
    %9 = vector.extract_strided_slice %1 {offsets = [0, 0, 0], sizes = [1, 1, 16], strides = [1, 1, 1]} : vector<1x3x16xf32> to vector<1x1x16xf32>
    %10 = vector.shape_cast %9 : vector<1x1x16xf32> to vector<1x16xf32>
    %11 = vector.extract_strided_slice %1 {offsets = [0, 1, 0], sizes = [1, 1, 16], strides = [1, 1, 1]} : vector<1x3x16xf32> to vector<1x1x16xf32>
    %12 = vector.shape_cast %11 : vector<1x1x16xf32> to vector<1x16xf32>
    %13 = vector.extract_strided_slice %1 {offsets = [0, 2, 0], sizes = [1, 1, 16], strides = [1, 1, 1]} : vector<1x3x16xf32> to vector<1x1x16xf32>
    %14 = vector.shape_cast %13 : vector<1x1x16xf32> to vector<1x16xf32>
    %15 = vector.extract_strided_slice %2 {offsets = [0, 0, 0], sizes = [1, 1, 16], strides = [1, 1, 1]} : vector<1x3x16xf32> to vector<1x1x16xf32>
    %16 = vector.shape_cast %15 : vector<1x1x16xf32> to vector<1x16xf32>
    %17 = vector.extract_strided_slice %2 {offsets = [0, 1, 0], sizes = [1, 1, 16], strides = [1, 1, 1]} : vector<1x3x16xf32> to vector<1x1x16xf32>
    %18 = vector.shape_cast %17 : vector<1x1x16xf32> to vector<1x16xf32>
    %19 = vector.extract_strided_slice %2 {offsets = [0, 2, 0], sizes = [1, 1, 16], strides = [1, 1, 1]} : vector<1x3x16xf32> to vector<1x1x16xf32>
    %20 = vector.shape_cast %19 : vector<1x1x16xf32> to vector<1x16xf32>
    %21 = arith.subf %4, %16 : vector<1x16xf32>
    %22 = arith.subf %6, %18 : vector<1x16xf32>
    %23 = arith.subf %8, %20 : vector<1x16xf32>
    %24 = arith.mulf %21, %21 : vector<1x16xf32>
    %25 = arith.mulf %22, %22 : vector<1x16xf32>
    %26 = arith.addf %24, %25 : vector<1x16xf32>
    %27 = arith.mulf %23, %23 : vector<1x16xf32>
    %28 = arith.addf %26, %27 : vector<1x16xf32>
    %cst = arith.constant 1.000000e-03 : f32
    %29 = vector.broadcast %cst : f32 to vector<1x16xf32>
    %30 = arith.addf %28, %29 : vector<1x16xf32>
    %31 = math.rsqrt %30 : vector<1x16xf32>
    %32 = arith.mulf %21, %31 : vector<1x16xf32>
    %33 = arith.mulf %22, %31 : vector<1x16xf32>
    %34 = arith.mulf %23, %31 : vector<1x16xf32>
    %35 = arith.subf %4, %10 : vector<1x16xf32>
    %36 = arith.subf %6, %12 : vector<1x16xf32>
    %37 = arith.subf %8, %14 : vector<1x16xf32>
    %38 = arith.mulf %35, %35 : vector<1x16xf32>
    %39 = arith.mulf %36, %36 : vector<1x16xf32>
    %40 = arith.addf %38, %39 : vector<1x16xf32>
    %41 = arith.mulf %37, %37 : vector<1x16xf32>
    %42 = arith.addf %40, %41 : vector<1x16xf32>
    %cst_8 = arith.constant 1.000000e-03 : f32
    %43 = vector.broadcast %cst_8 : f32 to vector<1x16xf32>
    %44 = arith.addf %42, %43 : vector<1x16xf32>
    %45 = math.rsqrt %44 : vector<1x16xf32>
    %46 = arith.mulf %35, %45 : vector<1x16xf32>
    %47 = arith.mulf %36, %45 : vector<1x16xf32>
    %48 = arith.mulf %37, %45 : vector<1x16xf32>
    %49 = arith.addf %32, %46 : vector<1x16xf32>
    %50 = arith.addf %33, %47 : vector<1x16xf32>
    %51 = arith.addf %34, %48 : vector<1x16xf32>
    %52 = arith.mulf %49, %49 : vector<1x16xf32>
    %53 = arith.mulf %50, %50 : vector<1x16xf32>
    %54 = arith.addf %52, %53 : vector<1x16xf32>
    %55 = arith.mulf %51, %51 : vector<1x16xf32>
    %56 = arith.addf %54, %55 : vector<1x16xf32>
    %cst_9 = arith.constant 1.000000e-03 : f32
    %57 = vector.broadcast %cst_9 : f32 to vector<1x16xf32>
    %58 = arith.addf %56, %57 : vector<1x16xf32>
    %59 = math.rsqrt %58 : vector<1x16xf32>
    %60 = arith.mulf %49, %59 : vector<1x16xf32>
    %61 = arith.mulf %50, %59 : vector<1x16xf32>
    %62 = arith.mulf %51, %59 : vector<1x16xf32>
    %cst_10 = arith.constant 1.015000e+00 : f32
    %63 = vector.broadcast %cst_10 : f32 to vector<1x16xf32>
    %64 = arith.mulf %63, %60 : vector<1x16xf32>
    %65 = arith.addf %4, %64 : vector<1x16xf32>
    %cst_11 = arith.constant 1.015000e+00 : f32
    %66 = vector.broadcast %cst_11 : f32 to vector<1x16xf32>
    %67 = arith.mulf %66, %61 : vector<1x16xf32>
    %68 = arith.addf %6, %67 : vector<1x16xf32>
    %cst_12 = arith.constant 1.015000e+00 : f32
    %69 = vector.broadcast %cst_12 : f32 to vector<1x16xf32>
    %70 = arith.mulf %69, %62 : vector<1x16xf32>
    %71 = arith.addf %8, %70 : vector<1x16xf32>
    %72 = tpu.concatenate %65, %68, %71 in 0 : vector<1x16xf32>, vector<1x16xf32>, vector<1x16xf32> -> vector<3x16xf32>
    %73 = vector.shape_cast %72 : vector<3x16xf32> to vector<1x3x16xf32>
    %c0_13 = arith.constant 0 : index
    %c0_14 = arith.constant 0 : index
    %c0_15 = arith.constant 0 : index
    %74 = vector.load %arg14[%c0_13, %c0_14, %c0_15] : memref<1x3x16xf32, #tpu.memory_space<vmem>>, vector<1x3x16xf32>
    tpu.vector_store %arg14[%c0_13, %c0_14, %c0_15], %73 {strides = array<i32>} : memref<1x3x16xf32, #tpu.memory_space<vmem>>, vector<1x3x16xf32>,
    %c0_16 = arith.constant 0 : index
    %c0_17 = arith.constant 0 : index
    %c0_18 = arith.constant 0 : index
    %c0_19 = arith.constant 0 : index
    %75 = vector.load %arg5[%c0_16, %c0_17, %c0_18, %c0_19] : memref<1x3x8x16xf32, #tpu.memory_space<vmem>>, vector<1x3x8x16xf32>
    %c0_20 = arith.constant 0 : index
    %c0_21 = arith.constant 0 : index
    %c0_22 = arith.constant 0 : index
    %c0_23 = arith.constant 0 : index
    %76 = vector.load %arg6[%c0_20, %c0_21, %c0_22, %c0_23] : memref<1x3x8x16xf32, #tpu.memory_space<vmem>>, vector<1x3x8x16xf32>
    %77 = vector.extract_strided_slice %75 {offsets = [0, 0, 0, 0], sizes = [1, 1, 8, 16], strides = [1, 1, 1, 1]} : vector<1x3x8x16xf32> to vector<1x1x8x16xf32>
    %78 = vector.shape_cast %77 : vector<1x1x8x16xf32> to vector<8x16xf32>
    %79 = vector.extract_strided_slice %75 {offsets = [0, 1, 0, 0], sizes = [1, 1, 8, 16], strides = [1, 1, 1, 1]} : vector<1x3x8x16xf32> to vector<1x1x8x16xf32>
    %80 = vector.shape_cast %79 : vector<1x1x8x16xf32> to vector<8x16xf32>
    %81 = vector.extract_strided_slice %75 {offsets = [0, 2, 0, 0], sizes = [1, 1, 8, 16], strides = [1, 1, 1, 1]} : vector<1x3x8x16xf32> to vector<1x1x8x16xf32>
    %82 = vector.shape_cast %81 : vector<1x1x8x16xf32> to vector<8x16xf32>
    %83 = vector.extract_strided_slice %76 {offsets = [0, 0, 0, 0], sizes = [1, 1, 8, 16], strides = [1, 1, 1, 1]} : vector<1x3x8x16xf32> to vector<1x1x8x16xf32>
    %84 = vector.shape_cast %83 : vector<1x1x8x16xf32> to vector<8x16xf32>
    %85 = vector.extract_strided_slice %76 {offsets = [0, 1, 0, 0], sizes = [1, 1, 8, 16], strides = [1, 1, 1, 1]} : vector<1x3x8x16xf32> to vector<1x1x8x16xf32>
    %86 = vector.shape_cast %85 : vector<1x1x8x16xf32> to vector<8x16xf32>
    %87 = vector.extract_strided_slice %76 {offsets = [0, 2, 0, 0], sizes = [1, 1, 8, 16], strides = [1, 1, 1, 1]} : vector<1x3x8x16xf32> to vector<1x1x8x16xf32>
    %88 = vector.shape_cast %87 : vector<1x1x8x16xf32> to vector<8x16xf32>
    %89 = vector.broadcast %4 : vector<1x16xf32> to vector<8x16xf32>
    %90 = arith.subf %89, %78 : vector<8x16xf32>
    %91 = vector.broadcast %6 : vector<1x16xf32> to vector<8x16xf32>
    %92 = arith.subf %91, %80 : vector<8x16xf32>
    %93 = vector.broadcast %8 : vector<1x16xf32> to vector<8x16xf32>
    %94 = arith.subf %93, %82 : vector<8x16xf32>
    %95 = arith.mulf %90, %90 : vector<8x16xf32>
    %96 = arith.mulf %92, %92 : vector<8x16xf32>
    %97 = arith.addf %95, %96 : vector<8x16xf32>
    %98 = arith.mulf %94, %94 : vector<8x16xf32>
    %99 = arith.addf %97, %98 : vector<8x16xf32>
    %cst_24 = arith.constant 1.000000e-03 : f32
    %100 = vector.broadcast %cst_24 : f32 to vector<8x16xf32>
    %101 = arith.addf %99, %100 : vector<8x16xf32>
    %102 = math.rsqrt %101 : vector<8x16xf32>
    %103 = vector.broadcast %4 : vector<1x16xf32> to vector<8x16xf32>
    %104 = arith.subf %103, %84 : vector<8x16xf32>
    %105 = vector.broadcast %6 : vector<1x16xf32> to vector<8x16xf32>
    %106 = arith.subf %105, %86 : vector<8x16xf32>
    %107 = vector.broadcast %8 : vector<1x16xf32> to vector<8x16xf32>
    %108 = arith.subf %107, %88 : vector<8x16xf32>
    %109 = arith.mulf %104, %104 : vector<8x16xf32>
    %110 = arith.mulf %106, %106 : vector<8x16xf32>
    %111 = arith.addf %109, %110 : vector<8x16xf32>
    %112 = arith.mulf %108, %108 : vector<8x16xf32>
    %113 = arith.addf %111, %112 : vector<8x16xf32>
    %cst_25 = arith.constant 1.000000e-03 : f32
    %114 = vector.broadcast %cst_25 : f32 to vector<8x16xf32>
    %115 = arith.addf %113, %114 : vector<8x16xf32>
    %116 = math.rsqrt %115 : vector<8x16xf32>
    %117 = vector.broadcast %65 : vector<1x16xf32> to vector<8x16xf32>
    %118 = arith.subf %117, %84 : vector<8x16xf32>
    %119 = vector.broadcast %68 : vector<1x16xf32> to vector<8x16xf32>
    %120 = arith.subf %119, %86 : vector<8x16xf32>
    %121 = vector.broadcast %71 : vector<1x16xf32> to vector<8x16xf32>
    %122 = arith.subf %121, %88 : vector<8x16xf32>
    %123 = arith.mulf %118, %118 : vector<8x16xf32>
    %124 = arith.mulf %120, %120 : vector<8x16xf32>
    %125 = arith.addf %123, %124 : vector<8x16xf32>
    %126 = arith.mulf %122, %122 : vector<8x16xf32>
    %127 = arith.addf %125, %126 : vector<8x16xf32>
    %cst_26 = arith.constant 1.000000e-03 : f32
    %128 = vector.broadcast %cst_26 : f32 to vector<8x16xf32>
    %129 = arith.addf %127, %128 : vector<8x16xf32>
    %130 = math.rsqrt %129 : vector<8x16xf32>
    %131 = vector.broadcast %65 : vector<1x16xf32> to vector<8x16xf32>
    %132 = arith.subf %131, %78 : vector<8x16xf32>
    %133 = vector.broadcast %68 : vector<1x16xf32> to vector<8x16xf32>
    %134 = arith.subf %133, %80 : vector<8x16xf32>
    %135 = vector.broadcast %71 : vector<1x16xf32> to vector<8x16xf32>
    %136 = arith.subf %135, %82 : vector<8x16xf32>
    %137 = arith.mulf %132, %132 : vector<8x16xf32>
    %138 = arith.mulf %134, %134 : vector<8x16xf32>
    %139 = arith.addf %137, %138 : vector<8x16xf32>
    %140 = arith.mulf %136, %136 : vector<8x16xf32>
    %141 = arith.addf %139, %140 : vector<8x16xf32>
    %cst_27 = arith.constant 1.000000e-03 : f32
    %142 = vector.broadcast %cst_27 : f32 to vector<8x16xf32>
    %143 = arith.addf %141, %142 : vector<8x16xf32>
    %144 = math.rsqrt %143 : vector<8x16xf32>
    %145 = arith.subf %102, %116 : vector<8x16xf32>
    %146 = arith.addf %145, %130 : vector<8x16xf32>
    %147 = arith.subf %146, %144 : vector<8x16xf32>
    %cst_28 = arith.constant 2.788800e+01 : f32
    %148 = vector.broadcast %cst_28 : f32 to vector<8x16xf32>
    %149 = arith.mulf %148, %147 : vector<8x16xf32>
    %cst_29 = arith.constant 1.000000e-03 : f32
    %150 = vector.broadcast %cst_29 : f32 to vector<8x16xf32>
    %151 = arith.addf %99, %150 : vector<8x16xf32>
    %cst_30 = arith.constant 1.296000e+01 : f32
    %152 = vector.broadcast %cst_30 : f32 to vector<8x16xf32>
    %153 = arith.cmpf olt, %151, %152 : vector<8x16xf32>
    %c0_31 = arith.constant 0 : index
    %c0_32 = arith.constant 0 : index
    %c0_33 = arith.constant 0 : index
    %154 = vector.load %arg10[%c0_31, %c0_32, %c0_33] : memref<1x8x16xi32, #tpu.memory_space<vmem>>, vector<1x8x16xi32>
    %155 = vector.shape_cast %154 : vector<1x8x16xi32> to vector<8x16xi32>
    %c0_34 = arith.constant 0 : index
    %c0_35 = arith.constant 0 : index
    %c0_36 = arith.constant 0 : index
    %156 = vector.load %arg9[%c0_34, %c0_35, %c0_36] : memref<1x8x16xi32, #tpu.memory_space<vmem>>, vector<1x8x16xi32>
    %157 = vector.shape_cast %156 : vector<1x8x16xi32> to vector<8x16xi32>
    %c0_37 = arith.constant 0 : index
    %c0_38 = arith.constant 0 : index
    %c0_39 = arith.constant 0 : index
    %158 = vector.load %arg7[%c0_37, %c0_38, %c0_39] : memref<1x1x16xi32, #tpu.memory_space<vmem>>, vector<1x1x16xi32>
    %159 = vector.shape_cast %158 : vector<1x1x16xi32> to vector<1x16xi32>
    %c0_40 = arith.constant 0 : index
    %c0_41 = arith.constant 0 : index
    %c0_42 = arith.constant 0 : index
    %160 = vector.load %arg8[%c0_40, %c0_41, %c0_42] : memref<1x1x16xf32, #tpu.memory_space<vmem>>, vector<1x1x16xf32>
    %161 = vector.shape_cast %160 : vector<1x1x16xf32> to vector<1x16xf32>
    %c0_43 = arith.constant 0 : index
    %c0_44 = arith.constant 0 : index
    %c0_45 = arith.constant 0 : index
    %162 = vector.load %arg11[%c0_43, %c0_44, %c0_45] : memref<1x8x16xf32, #tpu.memory_space<vmem>>, vector<1x8x16xf32>
    %163 = vector.shape_cast %162 : vector<1x8x16xf32> to vector<8x16xf32>
    %c16_i32 = arith.constant 16 : i32
    %164 = arith.muli %arg1, %c16_i32 : i32
    %165 = tpu.iota {dimensions = array<i32: 1>} : vector<8x16xi32>
    %166 = vector.broadcast %164 : i32 to vector<8x16xi32>
    %167 = arith.addi %166, %165 : vector<8x16xi32>
    %168 = arith.subi %155, %167 : vector<8x16xi32>
    %169 = math.absi %168 : vector<8x16xi32>
    %170 = arith.sitofp %169 : vector<8x16xi32> to vector<8x16xf32>
    %cst_46 = arith.constant 3.000000e+00 : f32
    %171 = vector.broadcast %cst_46 : f32 to vector<8x16xf32>
    %172 = arith.cmpf olt, %170, %171 : vector<8x16xf32>
    %173 = vector.broadcast %159 : vector<1x16xi32> to vector<8x16xi32>
    %174 = arith.cmpi eq, %173, %157 : vector<8x16xi32>
    %175 = arith.andi %172, %174 : vector<8x16xi1>
    %cst_47 = arith.constant dense<true> : vector<8x16xi1>
    %176 = arith.xori %175, %cst_47 : vector<8x16xi1>
    %c0_i32 = arith.constant 0 : i32
    %177 = vector.broadcast %c0_i32 : i32 to vector<8x16xi32>
    %178 = arith.cmpi sgt, %157, %177 : vector<8x16xi32>
    %179 = arith.andi %153, %178 : vector<8x16xi1>
    %180 = arith.andi %176, %179 : vector<8x16xi1>
    %181 = vector.broadcast %161 : vector<1x16xf32> to vector<8x16xf32>
    %182 = arith.mulf %163, %181 : vector<8x16xf32>
    %183 = arith.extui %180 : vector<8x16xi1> to vector<8x16xi32>
    %184 = arith.sitofp %183 : vector<8x16xi32> to vector<8x16xf32>
    %185 = arith.mulf %182, %184 : vector<8x16xf32>
    %186 = vector.shape_cast %185 : vector<8x16xf32> to vector<1x8x16xf32>
    %c0_48 = arith.constant 0 : index
    %c0_49 = arith.constant 0 : index
    %c0_50 = arith.constant 0 : index
    %187 = vector.load %arg13[%c0_48, %c0_49, %c0_50] : memref<1x8x16xf32, #tpu.memory_space<vmem>>, vector<1x8x16xf32>
    tpu.vector_store %arg13[%c0_48, %c0_49, %c0_50], %186 {strides = array<i32>} : memref<1x8x16xf32, #tpu.memory_space<vmem>>, vector<1x8x16xf32>,
    %cst_51 = arith.constant -5.000000e-01 : f32
    %188 = vector.broadcast %cst_51 : f32 to vector<8x16xf32>
    %189 = arith.cmpf olt, %149, %188 : vector<8x16xf32>
    %cst_52 = arith.constant 0.000000e+00 : f32
    %190 = vector.broadcast %cst_52 : f32 to vector<8x16xf32>
    %191 = arith.select %189, %185, %190 : vector<8x16xi1>, vector<8x16xf32>
    %192 = vector.shape_cast %191 : vector<8x16xf32> to vector<1x8x16xf32>
    %c0_53 = arith.constant 0 : index
    %c0_54 = arith.constant 0 : index
    %c0_55 = arith.constant 0 : index
    %193 = vector.load %arg12[%c0_53, %c0_54, %c0_55] : memref<1x8x16xf32, #tpu.memory_space<vmem>>, vector<1x8x16xf32>
    tpu.vector_store %arg12[%c0_53, %c0_54, %c0_55], %192 {strides = array<i32>} : memref<1x8x16xf32, #tpu.memory_space<vmem>>, vector<1x8x16xf32>,
    return
  }
  func.func @transform_0(%arg0: i32, %arg1: i32) -> (i32, i32, i32) {
    %c0_i32 = arith.constant 0 : i32
    %c0_i32_0 = arith.constant 0 : i32
    return %arg0, %c0_i32, %arg1 : i32, i32, i32
  }
  func.func @transform_1(%arg0: i32, %arg1: i32) -> (i32, i32, i32) {
    %c0_i32 = arith.constant 0 : i32
    %c0_i32_0 = arith.constant 0 : i32
    return %arg0, %c0_i32, %arg1 : i32, i32, i32
  }
  func.func @transform_2(%arg0: i32, %arg1: i32) -> (i32, i32, i32) {
    %c0_i32 = arith.constant 0 : i32
    %c0_i32_0 = arith.constant 0 : i32
    return %arg0, %c0_i32, %arg1 : i32, i32, i32
  }
  func.func @transform_3(%arg0: i32, %arg1: i32) -> (i32, i32, i32, i32) {
    %c0_i32 = arith.constant 0 : i32
    %c0_i32_0 = arith.constant 0 : i32
    %c0_i32_1 = arith.constant 0 : i32
    return %arg0, %c0_i32, %c0_i32_0, %arg1 : i32, i32, i32, i32
  }
  func.func @transform_4(%arg0: i32, %arg1: i32) -> (i32, i32, i32, i32) {
    %c0_i32 = arith.constant 0 : i32
    %c0_i32_0 = arith.constant 0 : i32
    %c0_i32_1 = arith.constant 0 : i32
    return %arg0, %c0_i32, %c0_i32_0, %arg1 : i32, i32, i32, i32
  }
  func.func @transform_5(%arg0: i32, %arg1: i32) -> (i32, i32, i32) {
    %c0_i32 = arith.constant 0 : i32
    %c0_i32_0 = arith.constant 0 : i32
    return %arg0, %c0_i32, %arg1 : i32, i32, i32
  }
  func.func @transform_6(%arg0: i32, %arg1: i32) -> (i32, i32, i32) {
    %c0_i32 = arith.constant 0 : i32
    %c0_i32_0 = arith.constant 0 : i32
    return %arg0, %c0_i32, %arg1 : i32, i32, i32
  }
  func.func @transform_7(%arg0: i32, %arg1: i32) -> (i32, i32, i32) {
    %c0_i32 = arith.constant 0 : i32
    %c0_i32_0 = arith.constant 0 : i32
    return %arg0, %c0_i32, %arg1 : i32, i32, i32
  }
  func.func @transform_8(%arg0: i32, %arg1: i32) -> (i32, i32, i32) {
    %c0_i32 = arith.constant 0 : i32
    %c0_i32_0 = arith.constant 0 : i32
    return %arg0, %c0_i32, %arg1 : i32, i32, i32
  }
  func.func @transform_9(%arg0: i32, %arg1: i32) -> (i32, i32, i32) {
    %c0_i32 = arith.constant 0 : i32
    %c0_i32_0 = arith.constant 0 : i32
    return %arg0, %c0_i32, %arg1 : i32, i32, i32
  }
  func.func @transform_10(%arg0: i32, %arg1: i32) -> (i32, i32, i32) {
    %c0_i32 = arith.constant 0 : i32
    %c0_i32_0 = arith.constant 0 : i32
    return %arg0, %c0_i32, %arg1 : i32, i32, i32
  }
  func.func @transform_11(%arg0: i32, %arg1: i32) -> (i32, i32, i32) {
    %c0_i32 = arith.constant 0 : i32
    %c0_i32_0 = arith.constant 0 : i32
    return %arg0, %c0_i32, %arg1 : i32, i32, i32
  }
  func.func @transform_12(%arg0: i32, %arg1: i32) -> (i32, i32, i32) {
    %c0_i32 = arith.constant 0 : i32
    %c0_i32_0 = arith.constant 0 : i32
    return %arg0, %c0_i32, %arg1 : i32, i32, i32
  }
}

</mosaic_0001>

<llo_original>
// kernel: tpu_custom_call.1
$region0: #{tpu_custom_call.1}
  #allocation0 [shape = 'u32[]', space=smem, size = 0x4, offset = 0x4, fixed_abs, tag = 'smem constant byte address 0x4 - core index']
  #allocation1 [shape = 'u32[72,128]{1,0:T(1,128)}', space=vmem, size = 0x9000, scoped, tag = 'internal scratch']
  %s0 = inlined_call_operand.vmem [shape: f32[2,3,16], index: 0, kind: input, shape index: {}]
  %s1 = inlined_call_operand.vmem [shape: f32[2,3,16], index: 1, kind: input, shape index: {}]
  %s2 = inlined_call_operand.vmem [shape: f32[2,3,16], index: 2, kind: input, shape index: {}]
  %s3 = inlined_call_operand.hbm [shape: f32[2,3,8,16], index: 3, kind: input, shape index: {}]
  %s4 = inlined_call_operand.hbm [shape: f32[2,3,8,16], index: 4, kind: input, shape index: {}]
  %s5 = inlined_call_operand.vmem [shape: s32[2,1,16], index: 5, kind: input, shape index: {}]
  %s6 = inlined_call_operand.vmem [shape: f32[2,1,16], index: 6, kind: input, shape index: {}]
  %s7 = inlined_call_operand.vmem [shape: s32[2,8,16], index: 7, kind: input, shape index: {}]
  %s8 = inlined_call_operand.hbm [shape: s32[2,8,16], index: 8, kind: input, shape index: {}]
  %s9 = inlined_call_operand.vmem [shape: f32[2,8,16], index: 9, kind: input, shape index: {}]
  %s10 = inlined_call_operand.hbm [shape: f32[2,8,16], index: 10, kind: output, shape index: {0}]
  %s11 = inlined_call_operand.hbm [shape: f32[2,8,16], index: 11, kind: output, shape index: {1}]
  %s12 = inlined_call_operand.vmem [shape: f32[2,3,16], index: 12, kind: output, shape index: {2}]
  %13 = xla_tuple %s10, %s11, %s12
  %s14 = sld [smem:[#allocation0]]
  $region101: #{tpu_custom_call.1} parent=0
    _
  %s16 = ssub.s32 1, %s14
  %s17 = scalar_select 0, %s16, %s14
  $region1: #{tpu_custom_call.1} parent=0
    #allocation2 [shape = 'u8[24576]{0}', space=vmem, size = 0x6000, scoped, tag = 'input window, operand 3']
    #allocation3 [shape = 's32[2]{0}', space=sflag, size = 0x8, scoped, tag = 'scoped memory for tpu_custom_call.1']
    #allocation4 [shape = 's32[2]{0}', space=sflag, size = 0x8, scoped, tag = 'scoped memory for tpu_custom_call.1']
    #allocation5 [shape = 'u8[24576]{0}', space=vmem, size = 0x6000, scoped, tag = 'input window, operand 4']
    #allocation6 [shape = 's32[2]{0}', space=sflag, size = 0x8, scoped, tag = 'scoped memory for tpu_custom_call.1']
    #allocation7 [shape = 'u8[8192]{0}', space=vmem, size = 0x2000, scoped, tag = 'input window, operand 8']
    #allocation8 [shape = 'u8[8192]{0}', space=vmem, size = 0x2000, scoped, tag = 'output window, operand 0']
    #allocation9 [shape = 'u8[8192]{0}', space=vmem, size = 0x2000, scoped, tag = 'output window, operand 1']
    #allocation10 [shape = 's32[2]{0}', space=sflag, size = 0x8, scoped, tag = 'scoped memory for tpu_custom_call.1']
    %18 = vsyncpa [#allocation3], 0
    %s19 = scalar_lea.sflag [#allocation3], 1
    %20 = vsyncpa %s19, 0
    %21 = vsyncpa [#allocation6], 0
    %s22 = scalar_lea.sflag [#allocation6], 1
    %23 = vsyncpa %s22, 0
    %24 = vsyncpa [#allocation4], 0
    %s25 = scalar_lea.sflag [#allocation4], 1
    %26 = vsyncpa %s25, 0
    %27 = vsyncpa [#allocation10], 0
    %s28 = scalar_lea.sflag [#allocation10], 1
    %29 = vsyncpa %s28, 0
    loop: start=0, step=1, limit=4
    $region2: #{tpu_custom_call.1} parent=1 // loop_pre_header
      _
    $region3: #{tpu_custom_call.1} parent=1 // loop_header
      %s31 = sphi 0, %s35
      %p32 = scmp.ge.s32.totalorder %s31, 4
      %s38 = sphi 0, %s50
      %s39 = sphi 0, %s46
      %s40 = sphi 0, %s38
      %s41 = sphi 0, %s39
      %s42 = sphi 0, %s40
      %s43 = sphi 0, %s41
      %s55 = sphi 0, %s57
      %s58 = sphi 0, %s55
      %s59 = sphi 0, %s58
      %s75 = sphi 0, %s59
      %s83 = sphi 0, %s85
      %s86 = sphi 0, %s83
      %s87 = sphi 0, %s86
      %s103 = sphi 0, %s87
      %s111 = sphi 0, %s113
      %s114 = sphi 0, %s111
      %s115 = sphi 0, %s114
      %s131 = sphi 0, %s115
      %s139 = sphi 0, %s141
      %s142 = sphi 0, %s139
      %s143 = sphi 0, %s142
      %s159 = sphi 0, %s143
      %s167 = sphi 0, %s169
      %s170 = sphi 0, %s167
      %s171 = sphi 0, %s170
      %s187 = sphi 0, %s171
      %s195 = sphi 0, %s197
      %s198 = sphi 0, %s195
      %s199 = sphi 0, %s198
      %s215 = sphi 0, %s199
      %s223 = sphi 0, %s225
      %s226 = sphi 0, %s223
      %s227 = sphi 0, %s226
      %s243 = sphi 0, %s227
      %s251 = sphi 0, %s253
      %s254 = sphi 0, %s251
      %s255 = sphi 0, %s254
      %s271 = sphi 0, %s255
      %s279 = sphi 0, %s281
      %s282 = sphi 0, %s279
      %s283 = sphi 0, %s282
      %s299 = sphi 0, %s283
      %s307 = sphi 0, %s309
      %s310 = sphi 0, %s307
      %s311 = sphi 0, %s310
      %s327 = sphi 0, %s311
      %s335 = sphi 0, %s337
      %s338 = sphi 0, %s335
      %s339 = sphi 0, %s338
      %s355 = sphi 0, %s339
      %s363 = sphi 0, %s365
      %s366 = sphi 0, %s363
      %s367 = sphi 0, %s366
      %s383 = sphi 0, %s367
      %s391 = sphi 0, %s393
      %s394 = sphi 0, %s391
      %s395 = sphi 0, %s394
      %s411 = sphi 0, %s395
    $region4: #{tpu_custom_call.1} parent=1 // loop_header_branch
      %34 = sbr.rel (%p32) target = $region8
    $region5: #{tpu_custom_call.1} parent=1 // loop_body
      %s36 = ssub.s32 %s31, 1
      %s37 = ssub.s32 %s31, 2
      %s44 = sadd.s32 1, %s39
      %p45 = scmp.ge.s32.totalorder %s44, 1
      %s46 = scalar_select %p45, 0, %s44
      %s47 = sadd.s32 1, %s38
      %s48 = scalar_select %p45, %s47, %s38
      %p49 = scmp.ge.s32.totalorder %s48, 2
      %s50 = scalar_select %p49, 0, %s48
      %s51 = ssub.s32 %s38, %s50
      %s52 = ssub.s32 %s39, %s46
      %s53 = sor.u32 %s51, %s52
      %p54 = scmp.eq.s32.totalorder %s53, 0
      %s56 = sadd.s32 %s55, 1
      %s57 = scalar_select %p54, %s55, %s56
      %p60 = pneg %p54
      %p61 = scmp.eq.s32.totalorder %s31, 1
      %p62 = por %p60, %p61
      %p63 = scmp.ne.s32.totalorder %s55, %s58
      %p64 = scmp.eq.s32.totalorder %s31, 0
      %p65 = por %p63, %p64
      %p66 = scmp.ne.s32.totalorder %s55, %s58
      %p67 = scmp.eq.s32.totalorder %s36, 1
      %p68 = por %p66, %p67
      %p69 = scmp.ne.s32.totalorder %s58, %s59
      %p70 = scmp.eq.s32.totalorder %s36, 0
      %p71 = por %p69, %p70
      %p72 = scmp.ne.s32.totalorder %s58, %s59
      %p73 = scmp.eq.s32.totalorder %s37, 1
      %p74 = por %p72, %p73
      %p76 = scmp.ne.s32.totalorder %s59, %s75
      %p77 = scmp.eq.s32.totalorder %s37, 0
      %p78 = por %p76, %p77
      %s79 = ssub.s32 %s38, %s50
      %s80 = ssub.s32 %s39, %s46
      %s81 = sor.u32 %s79, %s80
      %p82 = scmp.eq.s32.totalorder %s81, 0
      %s84 = sadd.s32 %s83, 1
      %s85 = scalar_select %p82, %s83, %s84
      %p88 = pneg %p82
      %p89 = scmp.eq.s32.totalorder %s31, 1
      %p90 = por %p88, %p89
      %p91 = scmp.ne.s32.totalorder %s83, %s86
      %p92 = scmp.eq.s32.totalorder %s31, 0
      %p93 = por %p91, %p92
      %p94 = scmp.ne.s32.totalorder %s83, %s86
      %p95 = scmp.eq.s32.totalorder %s36, 1
      %p96 = por %p94, %p95
      %p97 = scmp.ne.s32.totalorder %s86, %s87
      %p98 = scmp.eq.s32.totalorder %s36, 0
      %p99 = por %p97, %p98
      %p100 = scmp.ne.s32.totalorder %s86, %s87
      %p101 = scmp.eq.s32.totalorder %s37, 1
      %p102 = por %p100, %p101
      %p104 = scmp.ne.s32.totalorder %s87, %s103
      %p105 = scmp.eq.s32.totalorder %s37, 0
      %p106 = por %p104, %p105
      %s107 = ssub.s32 %s38, %s50
      %s108 = ssub.s32 %s39, %s46
      %s109 = sor.u32 %s107, %s108
      %p110 = scmp.eq.s32.totalorder %s109, 0
      %s112 = sadd.s32 %s111, 1
      %s113 = scalar_select %p110, %s111, %s112
      %p116 = pneg %p110
      %p117 = scmp.eq.s32.totalorder %s31, 1
      %p118 = por %p116, %p117
      %p119 = scmp.ne.s32.totalorder %s111, %s114
      %p120 = scmp.eq.s32.totalorder %s31, 0
      %p121 = por %p119, %p120
      %p122 = scmp.ne.s32.totalorder %s111, %s114
      %p123 = scmp.eq.s32.totalorder %s36, 1
      %p124 = por %p122, %p123
      %p125 = scmp.ne.s32.totalorder %s114, %s115
      %p126 = scmp.eq.s32.totalorder %s36, 0
      %p127 = por %p125, %p126
      %p128 = scmp.ne.s32.totalorder %s114, %s115
      %p129 = scmp.eq.s32.totalorder %s37, 1
      %p130 = por %p128, %p129
      %p132 = scmp.ne.s32.totalorder %s115, %s131
      %p133 = scmp.eq.s32.totalorder %s37, 0
      %p134 = por %p132, %p133
      %s135 = ssub.s32 %s38, %s50
      %s136 = ssub.s32 %s39, %s46
      %s137 = sor.u32 %s135, %s136
      %p138 = scmp.eq.s32.totalorder %s137, 0
      %s140 = sadd.s32 %s139, 1
      %s141 = scalar_select %p138, %s139, %s140
      %p144 = pneg %p138
      %p145 = scmp.eq.s32.totalorder %s31, 1
      %p146 = por %p144, %p145
      %p147 = scmp.ne.s32.totalorder %s139, %s142
      %p148 = scmp.eq.s32.totalorder %s31, 0
      %p149 = por %p147, %p148
      %p150 = scmp.ne.s32.totalorder %s139, %s142
      %p151 = scmp.eq.s32.totalorder %s36, 1
      %p152 = por %p150, %p151
      %p153 = scmp.ne.s32.totalorder %s142, %s143
      %p154 = scmp.eq.s32.totalorder %s36, 0
      %p155 = por %p153, %p154
      %p156 = scmp.ne.s32.totalorder %s142, %s143
      %p157 = scmp.eq.s32.totalorder %s37, 1
      %p158 = por %p156, %p157
      %p160 = scmp.ne.s32.totalorder %s143, %s159
      %p161 = scmp.eq.s32.totalorder %s37, 0
      %p162 = por %p160, %p161
      %s163 = ssub.s32 %s38, %s50
      %s164 = ssub.s32 %s39, %s46
      %s165 = sor.u32 %s163, %s164
      %p166 = scmp.eq.s32.totalorder %s165, 0
      %s168 = sadd.s32 %s167, 1
      %s169 = scalar_select %p166, %s167, %s168
      %p172 = pneg %p166
      %p173 = scmp.eq.s32.totalorder %s31, 1
      %p174 = por %p172, %p173
      %p175 = scmp.ne.s32.totalorder %s167, %s170
      %p176 = scmp.eq.s32.totalorder %s31, 0
      %p177 = por %p175, %p176
      %p178 = scmp.ne.s32.totalorder %s167, %s170
      %p179 = scmp.eq.s32.totalorder %s36, 1
      %p180 = por %p178, %p179
      %p181 = scmp.ne.s32.totalorder %s170, %s171
      %p182 = scmp.eq.s32.totalorder %s36, 0
      %p183 = por %p181, %p182
      %p184 = scmp.ne.s32.totalorder %s170, %s171
      %p185 = scmp.eq.s32.totalorder %s37, 1
      %p186 = por %p184, %p185
      %p188 = scmp.ne.s32.totalorder %s171, %s187
      %p189 = scmp.eq.s32.totalorder %s37, 0
      %p190 = por %p188, %p189
      %s191 = ssub.s32 %s38, %s50
      %s192 = ssub.s32 %s39, %s46
      %s193 = sor.u32 %s191, %s192
      %p194 = scmp.eq.s32.totalorder %s193, 0
      %s196 = sadd.s32 %s195, 1
      %s197 = scalar_select %p194, %s195, %s196
      %p200 = pneg %p194
      %p201 = scmp.eq.s32.totalorder %s31, 1
      %p202 = por %p200, %p201
      %p203 = scmp.ne.s32.totalorder %s195, %s198
      %p204 = scmp.eq.s32.totalorder %s31, 0
      %p205 = por %p203, %p204
      %p206 = scmp.ne.s32.totalorder %s195, %s198
      %p207 = scmp.eq.s32.totalorder %s36, 1
      %p208 = por %p206, %p207
      %p209 = scmp.ne.s32.totalorder %s198, %s199
      %p210 = scmp.eq.s32.totalorder %s36, 0
      %p211 = por %p209, %p210
      %p212 = scmp.ne.s32.totalorder %s198, %s199
      %p213 = scmp.eq.s32.totalorder %s37, 1
      %p214 = por %p212, %p213
      %p216 = scmp.ne.s32.totalorder %s199, %s215
      %p217 = scmp.eq.s32.totalorder %s37, 0
      %p218 = por %p216, %p217
      %s219 = ssub.s32 %s38, %s50
      %s220 = ssub.s32 %s39, %s46
      %s221 = sor.u32 %s219, %s220
      %p222 = scmp.eq.s32.totalorder %s221, 0
      %s224 = sadd.s32 %s223, 1
      %s225 = scalar_select %p222, %s223, %s224
      %p228 = pneg %p222
      %p229 = scmp.eq.s32.totalorder %s31, 1
      %p230 = por %p228, %p229
      %p231 = scmp.ne.s32.totalorder %s223, %s226
      %p232 = scmp.eq.s32.totalorder %s31, 0
      %p233 = por %p231, %p232
      %p234 = scmp.ne.s32.totalorder %s223, %s226
      %p235 = scmp.eq.s32.totalorder %s36, 1
      %p236 = por %p234, %p235
      %p237 = scmp.ne.s32.totalorder %s226, %s227
      %p238 = scmp.eq.s32.totalorder %s36, 0
      %p239 = por %p237, %p238
      %p240 = scmp.ne.s32.totalorder %s226, %s227
      %p241 = scmp.eq.s32.totalorder %s37, 1
      %p242 = por %p240, %p241
      %p244 = scmp.ne.s32.totalorder %s227, %s243
      %p245 = scmp.eq.s32.totalorder %s37, 0
      %p246 = por %p244, %p245
      %s247 = ssub.s32 %s38, %s50
      %s248 = ssub.s32 %s39, %s46
      %s249 = sor.u32 %s247, %s248
      %p250 = scmp.eq.s32.totalorder %s249, 0
      %s252 = sadd.s32 %s251, 1
      %s253 = scalar_select %p250, %s251, %s252
      %p256 = pneg %p250
      %p257 = scmp.eq.s32.totalorder %s31, 1
      %p258 = por %p256, %p257
      %p259 = scmp.ne.s32.totalorder %s251, %s254
      %p260 = scmp.eq.s32.totalorder %s31, 0
      %p261 = por %p259, %p260
      %p262 = scmp.ne.s32.totalorder %s251, %s254
      %p263 = scmp.eq.s32.totalorder %s36, 1
      %p264 = por %p262, %p263
      %p265 = scmp.ne.s32.totalorder %s254, %s255
      %p266 = scmp.eq.s32.totalorder %s36, 0
      %p267 = por %p265, %p266
      %p268 = scmp.ne.s32.totalorder %s254, %s255
      %p269 = scmp.eq.s32.totalorder %s37, 1
      %p270 = por %p268, %p269
      %p272 = scmp.ne.s32.totalorder %s255, %s271
      %p273 = scmp.eq.s32.totalorder %s37, 0
      %p274 = por %p272, %p273
      %s275 = ssub.s32 %s38, %s50
      %s276 = ssub.s32 %s39, %s46
      %s277 = sor.u32 %s275, %s276
      %p278 = scmp.eq.s32.totalorder %s277, 0
      %s280 = sadd.s32 %s279, 1
      %s281 = scalar_select %p278, %s279, %s280
      %p284 = pneg %p278
      %p285 = scmp.eq.s32.totalorder %s31, 1
      %p286 = por %p284, %p285
      %p287 = scmp.ne.s32.totalorder %s279, %s282
      %p288 = scmp.eq.s32.totalorder %s31, 0
      %p289 = por %p287, %p288
      %p290 = scmp.ne.s32.totalorder %s279, %s282
      %p291 = scmp.eq.s32.totalorder %s36, 1
      %p292 = por %p290, %p291
      %p293 = scmp.ne.s32.totalorder %s282, %s283
      %p294 = scmp.eq.s32.totalorder %s36, 0
      %p295 = por %p293, %p294
      %p296 = scmp.ne.s32.totalorder %s282, %s283
      %p297 = scmp.eq.s32.totalorder %s37, 1
      %p298 = por %p296, %p297
      %p300 = scmp.ne.s32.totalorder %s283, %s299
      %p301 = scmp.eq.s32.totalorder %s37, 0
      %p302 = por %p300, %p301
      %s303 = ssub.s32 %s38, %s50
      %s304 = ssub.s32 %s39, %s46
      %s305 = sor.u32 %s303, %s304
      %p306 = scmp.eq.s32.totalorder %s305, 0
      %s308 = sadd.s32 %s307, 1
      %s309 = scalar_select %p306, %s307, %s308
      %p312 = pneg %p306
      %p313 = scmp.eq.s32.totalorder %s31, 1
      %p314 = por %p312, %p313
      %p315 = scmp.ne.s32.totalorder %s307, %s310
      %p316 = scmp.eq.s32.totalorder %s31, 0
      %p317 = por %p315, %p316
      %p318 = scmp.ne.s32.totalorder %s307, %s310
      %p319 = scmp.eq.s32.totalorder %s36, 1
      %p320 = por %p318, %p319
      %p321 = scmp.ne.s32.totalorder %s310, %s311
      %p322 = scmp.eq.s32.totalorder %s36, 0
      %p323 = por %p321, %p322
      %p324 = scmp.ne.s32.totalorder %s310, %s311
      %p325 = scmp.eq.s32.totalorder %s37, 1
      %p326 = por %p324, %p325
      %p328 = scmp.ne.s32.totalorder %s311, %s327
      %p329 = scmp.eq.s32.totalorder %s37, 0
      %p330 = por %p328, %p329
      %s331 = ssub.s32 %s38, %s50
      %s332 = ssub.s32 %s39, %s46
      %s333 = sor.u32 %s331, %s332
      %p334 = scmp.eq.s32.totalorder %s333, 0
      %s336 = sadd.s32 %s335, 1
      %s337 = scalar_select %p334, %s335, %s336
      %p340 = pneg %p334
      %p341 = scmp.eq.s32.totalorder %s31, 1
      %p342 = por %p340, %p341
      %p343 = scmp.ne.s32.totalorder %s335, %s338
      %p344 = scmp.eq.s32.totalorder %s31, 0
      %p345 = por %p343, %p344
      %p346 = scmp.ne.s32.totalorder %s335, %s338
      %p347 = scmp.eq.s32.totalorder %s36, 1
      %p348 = por %p346, %p347
      %p349 = scmp.ne.s32.totalorder %s338, %s339
      %p350 = scmp.eq.s32.totalorder %s36, 0
      %p351 = por %p349, %p350
      %p352 = scmp.ne.s32.totalorder %s338, %s339
      %p353 = scmp.eq.s32.totalorder %s37, 1
      %p354 = por %p352, %p353
      %p356 = scmp.ne.s32.totalorder %s339, %s355
      %p357 = scmp.eq.s32.totalorder %s37, 0
      %p358 = por %p356, %p357
      %s359 = ssub.s32 %s38, %s50
      %s360 = ssub.s32 %s39, %s46
      %s361 = sor.u32 %s359, %s360
      %p362 = scmp.eq.s32.totalorder %s361, 0
      %s364 = sadd.s32 %s363, 1
      %s365 = scalar_select %p362, %s363, %s364
      %p368 = pneg %p362
      %p369 = scmp.eq.s32.totalorder %s31, 1
      %p370 = por %p368, %p369
      %p371 = scmp.ne.s32.totalorder %s363, %s366
      %p372 = scmp.eq.s32.totalorder %s31, 0
      %p373 = por %p371, %p372
      %p374 = scmp.ne.s32.totalorder %s363, %s366
      %p375 = scmp.eq.s32.totalorder %s36, 1
      %p376 = por %p374, %p375
      %p377 = scmp.ne.s32.totalorder %s366, %s367
      %p378 = scmp.eq.s32.totalorder %s36, 0
      %p379 = por %p377, %p378
      %p380 = scmp.ne.s32.totalorder %s366, %s367
      %p381 = scmp.eq.s32.totalorder %s37, 1
      %p382 = por %p380, %p381
      %p384 = scmp.ne.s32.totalorder %s367, %s383
      %p385 = scmp.eq.s32.totalorder %s37, 0
      %p386 = por %p384, %p385
      %s387 = ssub.s32 %s38, %s50
      %s388 = ssub.s32 %s39, %s46
      %s389 = sor.u32 %s387, %s388
      %p390 = scmp.eq.s32.totalorder %s389, 0
      %s392 = sadd.s32 %s391, 1
      %s393 = scalar_select %p390, %s391, %s392
      %p396 = pneg %p390
      %p397 = scmp.eq.s32.totalorder %s31, 1
      %p398 = por %p396, %p397
      %p399 = scmp.ne.s32.totalorder %s391, %s394
      %p400 = scmp.eq.s32.totalorder %s31, 0
      %p401 = por %p399, %p400
      %p402 = scmp.ne.s32.totalorder %s391, %s394
      %p403 = scmp.eq.s32.totalorder %s36, 1
      %p404 = por %p402, %p403
      %p405 = scmp.ne.s32.totalorder %s394, %s395
      %p406 = scmp.eq.s32.totalorder %s36, 0
      %p407 = por %p405, %p406
      %p408 = scmp.ne.s32.totalorder %s394, %s395
      %p409 = scmp.eq.s32.totalorder %s37, 1
      %p410 = por %p408, %p409
      %p412 = scmp.ne.s32.totalorder %s395, %s411
      %p413 = scmp.eq.s32.totalorder %s37, 0
      %p414 = por %p412, %p413
      %p415 = scmp.le.s32.totalorder 1, %s31
      %p416 = scmp.lt.s32.totalorder %s31, 3
      %p417 = pnand %p415, %p416
      %p418 = pneg %p417
      // Predicated region
      $region9: #{tpu_custom_call.1} parent=5 // pred_check
        _
      $region10: #{tpu_custom_call.1} parent=5 // pred_check_branch
        %420 = sbr.rel (%p417) target = $region12
      $region11: #{tpu_custom_call.1} parent=5 // pred_region
        %s421 = ssub.s32 %s31, 1
      $region12: #{tpu_custom_call.1} parent=5 // pred_fallthru
        _
      %p422 = scmp.lt.s32.totalorder %s31, 2
      // Predicated region
      $region13: #{tpu_custom_call.1} parent=5 // pred_check
        %p423 = pneg %p422
      $region14: #{tpu_custom_call.1} parent=5 // pred_check_branch
        %425 = sbr.rel (%p423) target = $region16
      $region15: #{tpu_custom_call.1} parent=5 // pred_region
        // Predicated region
        $region17: #{tpu_custom_call.1} parent=15 // pred_check
          %p426 = pneg %p65
        $region18: #{tpu_custom_call.1} parent=15 // pred_check_branch
          %428 = sbr.rel (%p426) target = $region20
        $region19: #{tpu_custom_call.1} parent=15 // pred_region
          %p429 = scmp.lt.s32.totalorder %s38, 1
          %s430 = scalar_select %p429, %s38, 1
          %p431 = scmp.lt.s32.totalorder %s39, 0
          %s432 = scalar_select %p431, %s39, 0
          %s433 = sadd.s32 %s432, %s430
          %s434 = smul.addr %s433, 4
          %s435 = scalar_lea.vmem %s0, %s434
        $region20: #{tpu_custom_call.1} parent=15 // pred_fallthru
          _
        // Predicated region
        $region21: #{tpu_custom_call.1} parent=15 // pred_check
          %p436 = pneg %p93
        $region22: #{tpu_custom_call.1} parent=15 // pred_check_branch
          %438 = sbr.rel (%p436) target = $region24
        $region23: #{tpu_custom_call.1} parent=15 // pred_region
          %p439 = scmp.lt.s32.totalorder %s38, 1
          %s440 = scalar_select %p439, %s38, 1
          %p441 = scmp.lt.s32.totalorder %s39, 0
          %s442 = scalar_select %p441, %s39, 0
          %s443 = sadd.s32 %s442, %s440
          %s444 = smul.addr %s443, 4
          %s445 = scalar_lea.vmem %s1, %s444
        $region24: #{tpu_custom_call.1} parent=15 // pred_fallthru
          _
        // Predicated region
        $region25: #{tpu_custom_call.1} parent=15 // pred_check
          %p446 = pneg %p121
        $region26: #{tpu_custom_call.1} parent=15 // pred_check_branch
          %448 = sbr.rel (%p446) target = $region28
        $region27: #{tpu_custom_call.1} parent=15 // pred_region
          %p449 = scmp.lt.s32.totalorder %s38, 1
          %s450 = scalar_select %p449, %s38, 1
          %p451 = scmp.lt.s32.totalorder %s39, 0
          %s452 = scalar_select %p451, %s39, 0
          %s453 = sadd.s32 %s452, %s450
          %s454 = smul.addr %s453, 4
          %s455 = scalar_lea.vmem %s2, %s454
        $region28: #{tpu_custom_call.1} parent=15 // pred_fallthru
          _
        // Predicated region
        $region29: #{tpu_custom_call.1} parent=15 // pred_check
          %p456 = pneg %p149
        $region30: #{tpu_custom_call.1} parent=15 // pred_check_branch
          %458 = sbr.rel (%p456) target = $region32
        $region31: #{tpu_custom_call.1} parent=15 // pred_region
          %s459 = sand.u32 %s139, 1
          %s460 = scalar_lea.sflag [#allocation3], %s459
          %s461 = sand.u32 %s139, 1
          %s462 = smul.addr %s461, 24
          %s463 = scalar_lea.vmem [#allocation2], %s462
          %465 = vsyncadd %s460, 0
          %s466 = smul.addr %s38, 3
          %s467 = sadd.s32 %s39, %s466
          %s468 = smul.addr %s467, 8
          %s469 = scalar_lea.hbm %s3, %s468
          %s470 = sshll.u32 %s469, 4
          %s471 = int_to_ptr.hbm [resolvable:$true] %s470
          %s472 = sshll.u32 %s463, 4
          %s473 = int_to_ptr.vmem [resolvable:$true] %s472
          %478 = dma.hbm_to_vmem [thread:$0]  %s471, 384, %s473, %s460, 128, 128, 8
        $region32: #{tpu_custom_call.1} parent=15 // pred_fallthru
          _
        // Predicated region
        $region33: #{tpu_custom_call.1} parent=15 // pred_check
          %p479 = pneg %p177
        $region34: #{tpu_custom_call.1} parent=15 // pred_check_branch
          %481 = sbr.rel (%p479) target = $region36
        $region35: #{tpu_custom_call.1} parent=15 // pred_region
          %s482 = sand.u32 %s31, 1
          %s483 = scalar_lea.sflag [#allocation6], %s482
          %s484 = sand.u32 %s167, 1
          %s485 = smul.addr %s484, 24
          %s486 = scalar_lea.vmem [#allocation5], %s485
          %488 = vsyncadd %s483, 0
          %s489 = smul.addr %s38, 3
          %s490 = sadd.s32 %s39, %s489
          %s491 = smul.addr %s490, 8
          %s492 = scalar_lea.hbm %s4, %s491
          %s493 = sshll.u32 %s492, 4
          %s494 = int_to_ptr.hbm [resolvable:$true] %s493
          %s495 = sshll.u32 %s486, 4
          %s496 = int_to_ptr.vmem [resolvable:$true] %s495
          %501 = dma.hbm_to_vmem [thread:$0]  %s494, 384, %s496, %s483, 128, 128, 8
        $region36: #{tpu_custom_call.1} parent=15 // pred_fallthru
          _
        // Predicated region
        $region37: #{tpu_custom_call.1} parent=15 // pred_check
          %p502 = pneg %p205
        $region38: #{tpu_custom_call.1} parent=15 // pred_check_branch
          %504 = sbr.rel (%p502) target = $region40
        $region39: #{tpu_custom_call.1} parent=15 // pred_region
          %p505 = scmp.lt.s32.totalorder %s38, 1
          %s506 = scalar_select %p505, %s38, 1
          %p507 = scmp.lt.s32.totalorder %s39, 0
          %s508 = scalar_select %p507, %s39, 0
          %s509 = sadd.s32 %s508, %s506
          %s510 = scalar_lea.vmem %s5, %s509
        $region40: #{tpu_custom_call.1} parent=15 // pred_fallthru
          _
        // Predicated region
        $region41: #{tpu_custom_call.1} parent=15 // pred_check
          %p511 = pneg %p233
        $region42: #{tpu_custom_call.1} parent=15 // pred_check_branch
          %513 = sbr.rel (%p511) target = $region44
        $region43: #{tpu_custom_call.1} parent=15 // pred_region
          %p514 = scmp.lt.s32.totalorder %s38, 1
          %s515 = scalar_select %p514, %s38, 1
          %p516 = scmp.lt.s32.totalorder %s39, 0
          %s517 = scalar_select %p516, %s39, 0
          %s518 = sadd.s32 %s517, %s515
          %s519 = scalar_lea.vmem %s6, %s518
        $region44: #{tpu_custom_call.1} parent=15 // pred_fallthru
          _
        // Predicated region
        $region45: #{tpu_custom_call.1} parent=15 // pred_check
          %p520 = pneg %p261
        $region46: #{tpu_custom_call.1} parent=15 // pred_check_branch
          %522 = sbr.rel (%p520) target = $region48
        $region47: #{tpu_custom_call.1} parent=15 // pred_region
          %p523 = scmp.lt.s32.totalorder %s38, 1
          %s524 = scalar_select %p523, %s38, 1
          %p525 = scmp.lt.s32.totalorder %s39, 0
          %s526 = scalar_select %p525, %s39, 0
          %s527 = sadd.s32 %s526, %s524
          %s528 = smul.addr %s527, 8
          %s529 = scalar_lea.vmem %s7, %s528
        $region48: #{tpu_custom_call.1} parent=15 // pred_fallthru
          _
        // Predicated region
        $region49: #{tpu_custom_call.1} parent=15 // pred_check
          %p530 = pneg %p289
        $region50: #{tpu_custom_call.1} parent=15 // pred_check_branch
          %532 = sbr.rel (%p530) target = $region52
        $region51: #{tpu_custom_call.1} parent=15 // pred_region
          %s533 = sand.u32 %s31, 1
          %s534 = scalar_lea.sflag [#allocation6], %s533
          %s535 = sand.u32 %s279, 1
          %s536 = smul.addr %s535, 8
          %s537 = scalar_lea.vmem [#allocation7], %s536
          %539 = vsyncadd %s534, 0
          %s540 = sadd.s32 %s39, %s38
          %s541 = smul.addr %s540, 8
          %s542 = scalar_lea.hbm %s8, %s541
          %s544 = sshll.u32 %s542, 4
          %s545 = int_to_ptr.hbm [resolvable:$true] %s544
          %s546 = sshll.u32 %s537, 4
          %s547 = int_to_ptr.vmem [resolvable:$true] %s546
          %549 = dma.hbm_to_vmem [thread:$0]  %s545, 128, %s547, %s534
        $region52: #{tpu_custom_call.1} parent=15 // pred_fallthru
          _
        // Predicated region
        $region53: #{tpu_custom_call.1} parent=15 // pred_check
          %p550 = pneg %p317
        $region54: #{tpu_custom_call.1} parent=15 // pred_check_branch
          %552 = sbr.rel (%p550) target = $region56
        $region55: #{tpu_custom_call.1} parent=15 // pred_region
          %p553 = scmp.lt.s32.totalorder %s38, 1
          %s554 = scalar_select %p553, %s38, 1
          %p555 = scmp.lt.s32.totalorder %s39, 0
          %s556 = scalar_select %p555, %s39, 0
          %s557 = sadd.s32 %s556, %s554
          %s558 = smul.addr %s557, 8
          %s559 = scalar_lea.vmem %s9, %s558
        $region56: #{tpu_custom_call.1} parent=15 // pred_fallthru
          _
      $region16: #{tpu_custom_call.1} parent=5 // pred_fallthru
        _
      %p560 = scmp.le.s32.totalorder 1, %s31
      %p561 = scmp.lt.s32.totalorder %s31, 3
      %p562 = pnand %p560, %p561
      %p563 = pneg %p562
      // Predicated region
      $region57: #{tpu_custom_call.1} parent=5 // pred_check
        _
      $region58: #{tpu_custom_call.1} parent=5 // pred_check_branch
        %565 = sbr.rel (%p562) target = $region60
      $region59: #{tpu_custom_call.1} parent=5 // pred_region
        %s566 = ssub.s32 %s31, 1
        %s567 = sand.u32 %s142, 1
        %s568 = scalar_lea.sflag [#allocation3], %s567
        %s569 = sand.u32 %s142, 1
        %s570 = smul.addr %s569, 24
        %s571 = scalar_lea.vmem [#allocation2], %s570
        // Predicated region
        $region61: #{tpu_custom_call.1} parent=59 // pred_check
          %p572 = pneg %p155
        $region62: #{tpu_custom_call.1} parent=59 // pred_check_branch
          %574 = sbr.rel (%p572) target = $region64
        $region63: #{tpu_custom_call.1} parent=59 // pred_region
          %576 = dma.done %s568, 384
        $region64: #{tpu_custom_call.1} parent=59 // pred_fallthru
          _
        %s577 = sand.u32 %s36, 1
        %s578 = scalar_lea.sflag [#allocation6], %s577
        %s579 = sand.u32 %s170, 1
        %s580 = smul.addr %s579, 24
        %s581 = scalar_lea.vmem [#allocation5], %s580
        // Predicated region
        $region65: #{tpu_custom_call.1} parent=59 // pred_check
          %p582 = pneg %p183
        $region66: #{tpu_custom_call.1} parent=59 // pred_check_branch
          %584 = sbr.rel (%p582) target = $region68
        $region67: #{tpu_custom_call.1} parent=59 // pred_region
          %586 = dma.done %s578, 384
        $region68: #{tpu_custom_call.1} parent=59 // pred_fallthru
          _
        %s587 = sand.u32 %s36, 1
        %s588 = scalar_lea.sflag [#allocation6], %s587
        %s589 = sand.u32 %s282, 1
        %s590 = smul.addr %s589, 8
        %s591 = scalar_lea.vmem [#allocation7], %s590
        // Predicated region
        $region69: #{tpu_custom_call.1} parent=59 // pred_check
          %p592 = pneg %p295
        $region70: #{tpu_custom_call.1} parent=59 // pred_check_branch
          %594 = sbr.rel (%p592) target = $region72
        $region71: #{tpu_custom_call.1} parent=59 // pred_region
          %596 = dma.done %s588, 128
        $region72: #{tpu_custom_call.1} parent=59 // pred_fallthru
          _
        %p597 = scmp.lt.s32.totalorder %s40, 1
        %s598 = scalar_select %p597, %s40, 1
        %p599 = scmp.lt.s32.totalorder %s41, 0
        %s600 = scalar_select %p599, %s41, 0
        %s601 = sadd.s32 %s600, %s598
        %s602 = smul.addr %s601, 4
        %s603 = scalar_lea.vmem %s0, %s602
        %p604 = pneg %p71
        %p605 = pneg %p68
        %p606 = scmp.lt.s32.totalorder %s40, 1
        %s607 = scalar_select %p606, %s40, 1
        %p608 = scmp.lt.s32.totalorder %s41, 0
        %s609 = scalar_select %p608, %s41, 0
        %s610 = sadd.s32 %s609, %s607
        %s611 = smul.addr %s610, 4
        %s612 = scalar_lea.vmem %s1, %s611
        %p613 = pneg %p99
        %p614 = pneg %p96
        %p615 = scmp.lt.s32.totalorder %s40, 1
        %s616 = scalar_select %p615, %s40, 1
        %p617 = scmp.lt.s32.totalorder %s41, 0
        %s618 = scalar_select %p617, %s41, 0
        %s619 = sadd.s32 %s618, %s616
        %s620 = smul.addr %s619, 4
        %s621 = scalar_lea.vmem %s2, %s620
        %p622 = pneg %p127
        %p623 = pneg %p124
        %s624 = sand.u32 %s142, 1
        %s625 = scalar_lea.sflag [#allocation3], %s624
        %s626 = sand.u32 %s142, 1
        %s627 = smul.addr %s626, 24
        %s628 = scalar_lea.vmem [#allocation2], %s627
        %p629 = pneg %p155
        %p630 = pneg %p152
        %s631 = sand.u32 %s36, 1
        %s632 = scalar_lea.sflag [#allocation6], %s631
        %s633 = sand.u32 %s170, 1
        %s634 = smul.addr %s633, 24
        %s635 = scalar_lea.vmem [#allocation5], %s634
        %p636 = pneg %p183
        %p637 = pneg %p180
        %p638 = scmp.lt.s32.totalorder %s40, 1
        %s639 = scalar_select %p638, %s40, 1
        %p640 = scmp.lt.s32.totalorder %s41, 0
        %s641 = scalar_select %p640, %s41, 0
        %s642 = sadd.s32 %s641, %s639
        %s643 = scalar_lea.vmem %s5, %s642
        %p644 = pneg %p211
        %p645 = pneg %p208
        %p646 = scmp.lt.s32.totalorder %s40, 1
        %s647 = scalar_select %p646, %s40, 1
        %p648 = scmp.lt.s32.totalorder %s41, 0
        %s649 = scalar_select %p648, %s41, 0
        %s650 = sadd.s32 %s649, %s647
        %s651 = scalar_lea.vmem %s6, %s650
        %p652 = pneg %p239
        %p653 = pneg %p236
        %p654 = scmp.lt.s32.totalorder %s40, 1
        %s655 = scalar_select %p654, %s40, 1
        %p656 = scmp.lt.s32.totalorder %s41, 0
        %s657 = scalar_select %p656, %s41, 0
        %s658 = sadd.s32 %s657, %s655
        %s659 = smul.addr %s658, 8
        %s660 = scalar_lea.vmem %s7, %s659
        %p661 = pneg %p267
        %p662 = pneg %p264
        %s663 = sand.u32 %s36, 1
        %s664 = scalar_lea.sflag [#allocation6], %s663
        %s665 = sand.u32 %s282, 1
        %s666 = smul.addr %s665, 8
        %s667 = scalar_lea.vmem [#allocation7], %s666
        %p668 = pneg %p295
        %p669 = pneg %p292
        %p670 = scmp.lt.s32.totalorder %s40, 1
        %s671 = scalar_select %p670, %s40, 1
        %p672 = scmp.lt.s32.totalorder %s41, 0
        %s673 = scalar_select %p672, %s41, 0
        %s674 = sadd.s32 %s673, %s671
        %s675 = smul.addr %s674, 8
        %s676 = scalar_lea.vmem %s9, %s675
        %p677 = pneg %p323
        %p678 = pneg %p320
        %p679 = pneg %p351
        %p680 = pneg %p348
        %s681 = sand.u32 %s338, 1
        %s682 = scalar_lea.sflag [#allocation4], %s681
        %s683 = sand.u32 %s338, 1
        %s684 = smul.addr %s683, 8
        %s685 = scalar_lea.vmem [#allocation8], %s684
        %p686 = pneg %p379
        %p687 = pneg %p376
        %s688 = sand.u32 %s366, 1
        %s689 = scalar_lea.sflag [#allocation10], %s688
        %s690 = sand.u32 %s366, 1
        %s691 = smul.addr %s690, 8
        %s692 = scalar_lea.vmem [#allocation9], %s691
        %p693 = pneg %p407
        %p694 = pneg %p404
        %p695 = scmp.lt.s32.totalorder %s40, 1
        %s696 = scalar_select %p695, %s40, 1
        %p697 = scmp.lt.s32.totalorder %s41, 0
        %s698 = scalar_select %p697, %s41, 0
        %s699 = sadd.s32 %s698, %s696
        %s700 = smul.addr %s699, 4
        %s701 = scalar_lea.vmem %s12, %s700
        %p702 = scmp.lt.s32.totalorder %s40, 1
        %s703 = scalar_select %p702, %s40, 1
        %p704 = scmp.lt.s32.totalorder %s41, 0
        %s705 = scalar_select %p704, %s41, 0
        %s706 = sadd.s32 %s705, %s703
        %s707 = smul.addr %s706, 4
        %s708 = scalar_lea.vmem %s0, %s707
        %p709 = scmp.lt.s32.totalorder %s40, 1
        %s710 = scalar_select %p709, %s40, 1
        %p711 = scmp.lt.s32.totalorder %s41, 0
        %s712 = scalar_select %p711, %s41, 0
        %s713 = sadd.s32 %s712, %s710
        %s714 = smul.addr %s713, 4
        %s715 = scalar_lea.vmem %s1, %s714
        %p716 = scmp.lt.s32.totalorder %s40, 1
        %s717 = scalar_select %p716, %s40, 1
        %p718 = scmp.lt.s32.totalorder %s41, 0
        %s719 = scalar_select %p718, %s41, 0
        %s720 = sadd.s32 %s719, %s717
        %s721 = smul.addr %s720, 4
        %s722 = scalar_lea.vmem %s2, %s721
        %p723 = scmp.lt.s32.totalorder %s40, 1
        %s724 = scalar_select %p723, %s40, 1
        %p725 = scmp.lt.s32.totalorder %s41, 0
        %s726 = scalar_select %p725, %s41, 0
        %s727 = sadd.s32 %s726, %s724
        %s728 = scalar_lea.vmem %s5, %s727
        %p729 = scmp.lt.s32.totalorder %s40, 1
        %s730 = scalar_select %p729, %s40, 1
        %p731 = scmp.lt.s32.totalorder %s41, 0
        %s732 = scalar_select %p731, %s41, 0
        %s733 = sadd.s32 %s732, %s730
        %s734 = scalar_lea.vmem %s6, %s733
        %p735 = scmp.lt.s32.totalorder %s40, 1
        %s736 = scalar_select %p735, %s40, 1
        %p737 = scmp.lt.s32.totalorder %s41, 0
        %s738 = scalar_select %p737, %s41, 0
        %s739 = sadd.s32 %s738, %s736
        %s740 = smul.addr %s739, 8
        %s741 = scalar_lea.vmem %s7, %s740
        %p742 = scmp.lt.s32.totalorder %s40, 1
        %s743 = scalar_select %p742, %s40, 1
        %p744 = scmp.lt.s32.totalorder %s41, 0
        %s745 = scalar_select %p744, %s41, 0
        %s746 = sadd.s32 %s745, %s743
        %s747 = smul.addr %s746, 8
        %s748 = scalar_lea.vmem %s9, %s747
        %p749 = scmp.lt.s32.totalorder %s40, 1
        %s750 = scalar_select %p749, %s40, 1
        %p751 = scmp.lt.s32.totalorder %s41, 0
        %s752 = scalar_select %p751, %s41, 0
        %s753 = sadd.s32 %s752, %s750
        %s754 = smul.addr %s753, 4
        %s755 = scalar_lea.vmem %s12, %s754
        %v756 = vld [vmem:[%s708] sm:$0x7]
        %v757 = vld [vmem:[%s715] sm:$0x7]
        %v758 = vld [vmem:[%s722] sm:$0x7]
        %v759 = vsub.f32 %v756, %v758
        %v760 = vmul.f32 %v759, %v759
        %v762 = vrot.slane %v760, 1
        %v764 = vadd.f32 %v760, %v762
        %v765 = vrot.slane %v760, 2
        %v767 = vadd.f32 %v764, %v765
        %v768 = vadd.f32 %v767, 0.001
        %v769 = vrsqrt.pop %v768
        %v770 = vmul.f32 %v769, %v768
        %v771 = vmul.f32 %v770, %v769
        %v772 = vmul.f32 0.5, %v771
        %v773 = vsub.f32 1.5, %v772
        %v774 = vmul.f32 %v769, %v773
        %vm775 = vweird.f32 %v768
        %vm776 = vweird.f32 %v769
        %vm777 = vmor %vm775, %vm776
        %v778 = vsel %vm777, %v769, %v774
        %v779 = vmul.f32 %v759, %v778
        %v781 = vrot.slane %v778, 7
        %v783 = vmul.f32 %v759, %v781
        %v784 = vrot.slane %v778, 6
        %v786 = vmul.f32 %v759, %v784
        %v787 = vsub.f32 %v756, %v757
        %v788 = vmul.f32 %v787, %v787
        %v790 = vrot.slane %v788, 1
        %v792 = vadd.f32 %v788, %v790
        %v793 = vrot.slane %v788, 2
        %v795 = vadd.f32 %v792, %v793
        %v796 = vadd.f32 %v795, 0.001
        %v797 = vrsqrt.pop %v796
        %v798 = vmul.f32 %v797, %v796
        %v799 = vmul.f32 %v798, %v797
        %v800 = vmul.f32 0.5, %v799
        %v801 = vsub.f32 1.5, %v800
        %v802 = vmul.f32 %v797, %v801
        %vm803 = vweird.f32 %v796
        %vm804 = vweird.f32 %v797
        %vm805 = vmor %vm803, %vm804
        %v806 = vsel %vm805, %v797, %v802
        %v807 = vmul.f32 %v787, %v806
        %v809 = vrot.slane %v806, 7
        %v811 = vmul.f32 %v787, %v809
        %v812 = vrot.slane %v806, 6
        %v814 = vmul.f32 %v787, %v812
        %v815 = vadd.f32 %v779, %v807
        %v816 = vadd.f32 %v783, %v811
        %v817 = vadd.f32 %v786, %v814
        %v818 = vmul.f32 %v815, %v815
        %v819 = vmul.f32 %v816, %v816
        %v821 = vrot.slane %v819, 1
        %v823 = vadd.f32 %v818, %v821
        %v824 = vmul.f32 %v817, %v817
        %v826 = vrot.slane %v824, 2
        %v828 = vadd.f32 %v823, %v826
        %v829 = vadd.f32 %v828, 0.001
        %v830 = vrsqrt.pop %v829
        %v831 = vmul.f32 %v830, %v829
        %v832 = vmul.f32 %v831, %v830
        %v833 = vmul.f32 0.5, %v832
        %v834 = vsub.f32 1.5, %v833
        %v835 = vmul.f32 %v830, %v834
        %vm836 = vweird.f32 %v829
        %vm837 = vweird.f32 %v830
        %vm838 = vmor %vm836, %vm837
        %v839 = vsel %vm838, %v830, %v835
        %v840 = vmul.f32 %v815, %v839
        %v842 = vrot.slane %v839, 7
        %v844 = vmul.f32 %v816, %v842
        %v845 = vrot.slane %v839, 6
        %v847 = vmul.f32 %v817, %v845
        %v848 = vmul.f32 %v840, 1.015
        %v849 = vadd.f32 %v756, %v848
        %v850 = vmul.f32 %v844, 1.015
        %v851 = vadd.f32 %v756, %v850
        %v852 = vmul.f32 %v847, 1.015
        %v853 = vadd.f32 %v756, %v852
        %vm854 = vcmask 1040384
        %v855 = vsel %vm854, %v849, %v851
        %vm856 = vcmask 1041408
        %v857 = vsel %vm856, %v855, %v853
        %vm858 = vcmask 124928
        %859 = vst.msk [vmem:[%s755] sm:$0x7] %vm858, %v857
        %v860 = vld [vmem:[%s571] sm:$0xff]
        %v861 = vld [vmem:[%s571 + $0x8] sm:$0xff]
        %v862 = vld [vmem:[%s571 + $0x10] sm:$0xff]
        %v863 = vld [vmem:[%s581] sm:$0xff]
        %v864 = vld [vmem:[%s581 + $0x8] sm:$0xff]
        %v865 = vld [vmem:[%s581 + $0x10] sm:$0xff]
        %v866 = vperm.slane %v756, 0
        %v867 = vsub.f32 %v866, %v860
        %v868 = vperm.slane %v756, 1
        %v869 = vsub.f32 %v868, %v861
        %v870 = vperm.slane %v756, 2
        %v871 = vsub.f32 %v870, %v862
        %v872 = vmul.f32 %v867, %v867
        %v873 = vmul.f32 %v869, %v869
        %v874 = vadd.f32 %v872, %v873
        %v875 = vmul.f32 %v871, %v871
        %v876 = vadd.f32 %v874, %v875
        %v877 = vadd.f32 %v876, 0.001
        %v878 = vrsqrt.pop %v877
        %v879 = vmul.f32 %v878, %v877
        %v880 = vmul.f32 %v879, %v878
        %v881 = vmul.f32 0.5, %v880
        %v882 = vsub.f32 1.5, %v881
        %v883 = vmul.f32 %v878, %v882
        %vm884 = vweird.f32 %v877
        %vm885 = vweird.f32 %v878
        %vm886 = vmor %vm884, %vm885
        %v887 = vsel %vm886, %v878, %v883
        %v888 = vsub.f32 %v866, %v863
        %v889 = vsub.f32 %v868, %v864
        %v890 = vsub.f32 %v870, %v865
        %v891 = vmul.f32 %v888, %v888
        %v892 = vmul.f32 %v889, %v889
        %v893 = vadd.f32 %v891, %v892
        %v894 = vmul.f32 %v890, %v890
        %v895 = vadd.f32 %v893, %v894
        %v896 = vadd.f32 %v895, 0.001
        %v897 = vrsqrt.pop %v896
        %v898 = vmul.f32 %v897, %v896
        %v899 = vmul.f32 %v898, %v897
        %v900 = vmul.f32 0.5, %v899
        %v901 = vsub.f32 1.5, %v900
        %v902 = vmul.f32 %v897, %v901
        %vm903 = vweird.f32 %v896
        %vm904 = vweird.f32 %v897
        %vm905 = vmor %vm903, %vm904
        %v906 = vsel %vm905, %v897, %v902
        %v907 = vperm.slane %v849, 0
        %v908 = vsub.f32 %v907, %v863
        %v909 = vperm.slane %v851, 1
        %v910 = vsub.f32 %v909, %v864
        %v911 = vperm.slane %v853, 2
        %v912 = vsub.f32 %v911, %v865
        %v913 = vmul.f32 %v908, %v908
        %v914 = vmul.f32 %v910, %v910
        %v915 = vadd.f32 %v913, %v914
        %v916 = vmul.f32 %v912, %v912
        %v917 = vadd.f32 %v915, %v916
        %v918 = vadd.f32 %v917, 0.001
        %v919 = vrsqrt.pop %v918
        %v920 = vmul.f32 %v919, %v918
        %v921 = vmul.f32 %v920, %v919
        %v922 = vmul.f32 0.5, %v921
        %v923 = vsub.f32 1.5, %v922
        %v924 = vmul.f32 %v919, %v923
        %vm925 = vweird.f32 %v918
        %vm926 = vweird.f32 %v919
        %vm927 = vmor %vm925, %vm926
        %v928 = vsel %vm927, %v919, %v924
        %v929 = vsub.f32 %v907, %v860
        %v930 = vsub.f32 %v909, %v861
        %v931 = vsub.f32 %v911, %v862
        %v932 = vmul.f32 %v929, %v929
        %v933 = vmul.f32 %v930, %v930
        %v934 = vadd.f32 %v932, %v933
        %v935 = vmul.f32 %v931, %v931
        %v936 = vadd.f32 %v934, %v935
        %v937 = vadd.f32 %v936, 0.001
        %v938 = vrsqrt.pop %v937
        %v939 = vmul.f32 %v938, %v937
        %v940 = vmul.f32 %v939, %v938
        %v941 = vmul.f32 0.5, %v940
        %v942 = vsub.f32 1.5, %v941
        %v943 = vmul.f32 %v938, %v942
        %vm944 = vweird.f32 %v937
        %vm945 = vweird.f32 %v938
        %vm946 = vmor %vm944, %vm945
        %v947 = vsel %vm946, %v938, %v943
        %v948 = vsub.f32 %v887, %v906
        %v949 = vadd.f32 %v948, %v928
        %v950 = vsub.f32 %v949, %v947
        %v951 = vmul.f32 %v950, 27.888
        %vm952 = vcmp.lt.f32.partialorder %v877, 12.96
        %v953 = vld [vmem:[%s591] sm:$0xff]
        %v954 = vld [vmem:[%s741] sm:$0xff]
        %v955 = vld [vmem:[%s728] sm:$0x1]
        %v956 = vld [vmem:[%s734] sm:$0x1]
        %v957 = vld [vmem:[%s748] sm:$0xff]
        %s958 = smul.u32 %s41, 16
        %v959 = vlaneseq
        %v960 = vand.u32 %v959, 127
        %v961 = vstv %s958
        %v962 = vadd.s32 %v961, %v960
        %v963 = vsub.s32 %v953, %v962
        %vm964 = vcmp.lt.s32.totalorder %v963, 0
        %v965 = vsub.s32 0, %v963
        %v966 = vsel %vm964, %v965, %v963
        %v967 = vcvt.s32.f32 %v966
        %vm968 = vcmp.lt.f32.partialorder %v967, 3.0
        %v969 = vperm.slane %v955, 0
        %vm970 = vcmp.eq.s32.totalorder %v969, %v954
        %vm971 = vmand %vm968, %vm970
        %vm972 = vmxor %vm971, 1
        %vm973 = vcmp.gt.s32.totalorder %v954, 0
        %vm974 = vmand %vm952, %vm973
        %vm975 = vmand %vm972, %vm974
        %v977 = vperm.slane %v956, 0
        %v979 = vmul.f32 %v957, %v977
        %v980 = vsel %vm975, 1, 0
        %v981 = vcvt.s32.f32 %v980
        %v982 = vmul.f32 %v979, %v981
        %vm983 = vcmask 130048
        %984 = vst.msk [vmem:[%s692] sm:$0xff] %vm983, %v982
        %vm985 = vcmp.lt.f32.partialorder %v951, -0.5
        %v986 = vsel %vm985, %v982, 0.0
        %987 = vst.msk [vmem:[%s685] sm:$0xff] %vm983, %v986
        %s988 = sand.u32 %s338, 1
        %s989 = scalar_lea.sflag [#allocation4], %s988
        %s990 = sand.u32 %s338, 1
        %s991 = smul.addr %s990, 8
        %s992 = scalar_lea.vmem [#allocation8], %s991
        %s993 = sand.u32 %s366, 1
        %s994 = scalar_lea.sflag [#allocation10], %s993
        %s995 = sand.u32 %s366, 1
        %s996 = smul.addr %s995, 8
        %s997 = scalar_lea.vmem [#allocation9], %s996
        %p998 = scmp.lt.s32.totalorder %s40, 1
        %s999 = scalar_select %p998, %s40, 1
        %p1000 = scmp.lt.s32.totalorder %s41, 0
        %s1001 = scalar_select %p1000, %s41, 0
        %s1002 = sadd.s32 %s1001, %s999
        %s1003 = smul.addr %s1002, 4
        %s1004 = scalar_lea.vmem %s12, %s1003
        // Predicated region
        $region73: #{tpu_custom_call.1} parent=59 // pred_check
          %p1005 = pneg %p348
        $region74: #{tpu_custom_call.1} parent=59 // pred_check_branch
          %1007 = sbr.rel (%p1005) target = $region76
        $region75: #{tpu_custom_call.1} parent=59 // pred_region
          %1009 = vsyncadd %s989, 0
          %s1010 = sadd.s32 %s41, %s40
          %s1011 = smul.addr %s1010, 8
          %s1012 = scalar_lea.hbm %s10, %s1011
          %s1014 = sshll.u32 %s992, 4
          %s1015 = int_to_ptr.vmem [resolvable:$true] %s1014
          %s1016 = sshll.u32 %s1012, 4
          %s1017 = int_to_ptr.hbm [resolvable:$true] %s1016
          %1019 = dma.vmem_to_hbm [thread:$0]  %s1015, 128, %s1017, %s989
        $region76: #{tpu_custom_call.1} parent=59 // pred_fallthru
          _
        // Predicated region
        $region77: #{tpu_custom_call.1} parent=59 // pred_check
          %p1020 = pneg %p376
        $region78: #{tpu_custom_call.1} parent=59 // pred_check_branch
          %1022 = sbr.rel (%p1020) target = $region80
        $region79: #{tpu_custom_call.1} parent=59 // pred_region
          %1024 = vsyncadd %s994, 0
          %s1025 = sadd.s32 %s41, %s40
          %s1026 = smul.addr %s1025, 8
          %s1027 = scalar_lea.hbm %s11, %s1026
          %s1029 = sshll.u32 %s997, 4
          %s1030 = int_to_ptr.vmem [resolvable:$true] %s1029
          %s1031 = sshll.u32 %s1027, 4
          %s1032 = int_to_ptr.hbm [resolvable:$true] %s1031
          %1034 = dma.vmem_to_hbm [thread:$0]  %s1030, 128, %s1032, %s994
        $region80: #{tpu_custom_call.1} parent=59 // pred_fallthru
          _
        // Predicated region
        $region81: #{tpu_custom_call.1} parent=59 // pred_check
          %p1035 = pneg %p404
        $region82: #{tpu_custom_call.1} parent=59 // pred_check_branch
          %1037 = sbr.rel (%p1035) target = $region84
        $region83: #{tpu_custom_call.1} parent=59 // pred_region
          _
        $region84: #{tpu_custom_call.1} parent=59 // pred_fallthru
          _
      $region60: #{tpu_custom_call.1} parent=5 // pred_fallthru
        _
      %p1038 = scmp.le.s32.totalorder 2, %s31
      // Predicated region
      $region85: #{tpu_custom_call.1} parent=5 // pred_check
        %p1039 = pneg %p1038
      $region86: #{tpu_custom_call.1} parent=5 // pred_check_branch
        %1041 = sbr.rel (%p1039) target = $region88
      $region87: #{tpu_custom_call.1} parent=5 // pred_region
        %s1042 = ssub.s32 %s31, 2
        // Predicated region
        $region89: #{tpu_custom_call.1} parent=87 // pred_check
          %p1043 = pneg %p354
        $region90: #{tpu_custom_call.1} parent=87 // pred_check_branch
          %1045 = sbr.rel (%p1043) target = $region92
        $region91: #{tpu_custom_call.1} parent=87 // pred_region
          %s1046 = sand.u32 %s339, 1
          %s1047 = scalar_lea.sflag [#allocation4], %s1046
          %s1048 = sand.u32 %s339, 1
          %s1049 = smul.addr %s1048, 8
          %s1050 = scalar_lea.vmem [#allocation8], %s1049
          %1052 = dma.done %s1047, 128
        $region92: #{tpu_custom_call.1} parent=87 // pred_fallthru
          _
        // Predicated region
        $region93: #{tpu_custom_call.1} parent=87 // pred_check
          %p1053 = pneg %p382
        $region94: #{tpu_custom_call.1} parent=87 // pred_check_branch
          %1055 = sbr.rel (%p1053) target = $region96
        $region95: #{tpu_custom_call.1} parent=87 // pred_region
          %s1056 = sand.u32 %s367, 1
          %s1057 = scalar_lea.sflag [#allocation10], %s1056
          %s1058 = sand.u32 %s367, 1
          %s1059 = smul.addr %s1058, 8
          %s1060 = scalar_lea.vmem [#allocation9], %s1059
          %1062 = dma.done %s1057, 128
        $region96: #{tpu_custom_call.1} parent=87 // pred_fallthru
          _
        // Predicated region
        $region97: #{tpu_custom_call.1} parent=87 // pred_check
          %p1063 = pneg %p410
        $region98: #{tpu_custom_call.1} parent=87 // pred_check_branch
          %1065 = sbr.rel (%p1063) target = $region100
        $region99: #{tpu_custom_call.1} parent=87 // pred_region
          %p1066 = scmp.lt.s32.totalorder %s42, 1
          %s1067 = scalar_select %p1066, %s42, 1
          %p1068 = scmp.lt.s32.totalorder %s43, 0
          %s1069 = scalar_select %p1068, %s43, 0
          %s1070 = sadd.s32 %s1069, %s1067
          %s1071 = smul.addr %s1070, 4
          %s1072 = scalar_lea.vmem %s12, %s1071
        $region100: #{tpu_custom_call.1} parent=87 // pred_fallthru
          _
      $region88: #{tpu_custom_call.1} parent=5 // pred_fallthru
        _
    $region6: #{tpu_custom_call.1} parent=1 // loop_footer
      %s35 = sadd.s32 1, %s31
    $region7: #{tpu_custom_call.1} parent=1 // loop_footer_branch
      %30 = sbr.rel target = $region3
    $region8: #{tpu_custom_call.1} parent=1 // loop_exit
      _
    %1073 = vsyncpa [#allocation3], 1
    %s1074 = scalar_lea.sflag [#allocation3], 1
    %1075 = vsyncpa %s1074, 1
    %1076 = vsyncpa [#allocation6], 1
    %s1077 = scalar_lea.sflag [#allocation6], 1
    %1078 = vsyncpa %s1077, 1
    %1079 = vsyncpa [#allocation4], 1
    %s1080 = scalar_lea.sflag [#allocation4], 1
    %1081 = vsyncpa %s1080, 1
    %1082 = vsyncpa [#allocation10], 1
    %s1083 = scalar_lea.sflag [#allocation10], 1
    %1084 = vsyncpa %s1083, 1

</llo_original>
